<compile_context>
chip_gen: v7x
topology: tpu7x:2x2x1
jax: 0.10.0
libtpu: 0.0.40
codegen_flags: <defaults>
</compile_context>

<pallas_src>
import functools
import math

import jax
import jax.numpy as jnp
from jax import lax
from jax.experimental import pallas as pl
from jax.experimental.pallas import tpu as pltpu

FF_HIDDEN = 2048
LN_EPS = 1e-5


def _layernorm(x, gamma, beta):
    mean = jnp.mean(x, axis=-1, keepdims=True)
    var = jnp.mean((x - mean) ** 2, axis=-1, keepdims=True)
    return (x - mean) * lax.rsqrt(var + LN_EPS) * gamma + beta


def _vmem_budget_bytes():
    """~85% of per-core VMEM (v5e/v6e ~109 MiB, v7x ~54 MiB); safe fallback."""
    try:
        cap = getattr(pltpu.get_tpu_info(), "vmem_capacity_bytes", None)
        if cap:
            return int(cap * 0.85)
    except Exception:
        pass
    return 96 << 20


def _divisor_tiles(n, candidates):
    return [c for c in candidates if c <= n and n % c == 0]


# ---------------------------------------------------------------------------
# Kernel 1: grouped multi-head attention + condense + residual + LayerNorm.
#   grid = (batch, row_tile, head_group); head_group is the reduction axis.
# ---------------------------------------------------------------------------
def _attention_kernel(xb_ref, xt_ref, wk_ref, bk_ref, wq_ref, bq_ref,
                      wv_ref, bv_ref, wc_ref, bc_ref, g1_ref, be1_ref,
                      mask_ref, y_ref, acc_ref, *, group, d_k, inv_scale):
    g = pl.program_id(2)

    @pl.when(g == 0)
    def _init():
        acc_ref[...] = jnp.zeros_like(acc_ref)

    xb = xb_ref[0]                               # (S, H)  bf16, whole sequence
    xt = xt_ref[0]                               # (tr, H) f32, this row tile
    xtb = xt.astype(jnp.bfloat16)
    mask = mask_ref[...]                         # (tr, S) additive 0 / -inf

    # Group-wide projections: N = group*d_k lanes -> near-full MXU width,
    # bf16 operands, f32 accumulation, f32 biases.
    k_t = jnp.dot(xtb, wk_ref[0], preferred_element_type=jnp.float32) + bk_ref[0]
    q_f = jnp.dot(xb, wq_ref[0], preferred_element_type=jnp.float32) + bq_ref[0]
    v_f = jnp.dot(xb, wv_ref[0], preferred_element_type=jnp.float32) + bv_ref[0]
    kb = k_t.astype(jnp.bfloat16)                # (tr, group*d_k)
    qb = q_f.astype(jnp.bfloat16)                # (S,  group*d_k)
    vb = v_f.astype(jnp.bfloat16)                # (S,  group*d_k)

    # Per-head score / softmax / PV (statically unrolled inside the group;
    # the (tr, S) slabs are lane-dense and only one head's are live at once).
    attns = []
    for h in range(group):
        sl = slice(h * d_k, (h + 1) * d_k)
        # w[i, j] = k_i . q_j    (== torch.bmm(k, q.transpose(1, 2)))
        w = lax.dot_general(kb[:, sl], qb[:, sl], (((1,), (1,)), ((), ())),
                            preferred_element_type=jnp.float32)     # (tr, S)
        w = jnp.floor(w * inv_scale) + mask       # torch `//`, then triu(-inf)
        m = jnp.max(w, axis=-1, keepdims=True)
        e = jnp.exp(w - m)
        denom = jnp.sum(e, axis=-1, keepdims=True)
        p = e * pl.reciprocal(denom, approx=True)                    # softmax
        attns.append(jnp.dot(p.astype(jnp.bfloat16), vb[:, sl],
                             preferred_element_type=jnp.float32)
                     .astype(jnp.bfloat16))                          # (tr, d_k)

    # cat(head attns) @ Wc_group: contraction is group*d_k wide (no narrow K).
    attn_cat = attns[0] if group == 1 else jnp.concatenate(attns, axis=-1)
    acc_ref[...] += jnp.dot(attn_cat, wc_ref[0],
                            preferred_element_type=jnp.float32)      # (tr, H)

    @pl.when(g == pl.num_programs(2) - 1)
    def _finalize():
        condensed = acc_ref[...] + bc_ref[...]
        y_ref[0] = _layernorm(xt + condensed, g1_ref[...], be1_ref[...])


# ---------------------------------------------------------------------------
# Kernel 2: feed-forward + residual + LayerNorm on (B*S, H) rows.
#   grid = (row_tiles, ff_tiles); ff is the reduction ("arbitrary") axis.
# ---------------------------------------------------------------------------
def _ffn_kernel(y_ref, w1_ref, b1_ref, w2_ref, b2_ref, g2_ref, be2_ref,
                o_ref, acc_ref):
    f = pl.program_id(1)

    @pl.when(f == 0)
    def _init():
        acc_ref[...] = jnp.zeros_like(acc_ref)

    yb = y_ref[...].astype(jnp.bfloat16)
    h1 = jnp.dot(yb, w1_ref[...], preferred_element_type=jnp.float32) + b1_ref[...]
    h1 = jnp.maximum(h1, 0.0)                                        # ReLU
    acc_ref[...] += jnp.dot(h1.astype(jnp.bfloat16), w2_ref[...],
                            preferred_element_type=jnp.float32)

    @pl.when(f == pl.num_programs(1) - 1)
    def _finalize():
        y = y_ref[...]
        h2 = acc_ref[...] + b2_ref[...]
        o_ref[...] = _layernorm(y + h2, g2_ref[...], be2_ref[...])


def make_params(key, hidden_size, num_head):
    d_k = hidden_size // num_head
    ks = jax.random.split(key, 10)
    scale = 0.05
    f32 = jnp.float32
    return {
        # per-head projections, head-major: (num_head, H, d_k)
        "wk": jax.random.normal(ks[0], (num_head, hidden_size, d_k), f32) * scale,
        "bk": jax.random.normal(ks[1], (num_head, 1, d_k), f32) * scale,
        "wq": jax.random.normal(ks[2], (num_head, hidden_size, d_k), f32) * scale,
        "bq": jax.random.normal(ks[3], (num_head, 1, d_k), f32) * scale,
        "wv": jax.random.normal(ks[4], (num_head, hidden_size, d_k), f32) * scale,
        "bv": jax.random.normal(ks[5], (num_head, 1, d_k), f32) * scale,
        # condense weight stored as (num_head, d_k, H)
        "wc": jax.random.normal(ks[6], (num_head, d_k, hidden_size), f32) * scale,
        "bc": jax.random.normal(ks[7], (1, hidden_size), f32) * scale,
        "g1": jnp.ones((1, hidden_size), f32),
        "be1": jnp.zeros((1, hidden_size), f32),
        "w1": jax.random.normal(ks[8], (hidden_size, FF_HIDDEN), f32) * scale,
        "b1": jnp.zeros((1, FF_HIDDEN), f32),
        "w2": jax.random.normal(ks[9], (FF_HIDDEN, hidden_size), f32) * scale,
        "b2": jnp.zeros((1, hidden_size), f32),
        "g2": jnp.ones((1, hidden_size), f32),
        "be2": jnp.zeros((1, hidden_size), f32),
    }


def transform_layer(x, params, num_head):
    B, S, H = x.shape
    d_k = H // num_head
    assert num_head * d_k == H, "hidden_size must be divisible by num_head"
    f32, bf16 = jnp.float32, jnp.bfloat16
    budget = _vmem_budget_bytes()

    # --- head grouping: smallest divisor of num_head with group*d_k >= 256 ---
    group = num_head
    for gcand in range(1, num_head + 1):
        if num_head % gcand == 0 and gcand * d_k >= 256:
            group = gcand
            break
    n_groups = num_head // group
    pg = group * d_k

    # --- grouped / pre-cast operands (host-side, once) ---
    def group_heads(w):  # (num_head, a, b) -> (n_groups, a, group*b)
        nh, a, b = w.shape
        return (w.reshape(n_groups, group, a, b)
                 .transpose(0, 2, 1, 3)
                 .reshape(n_groups, a, group * b))

    wk = group_heads(params["wk"]).astype(bf16)
    wq = group_heads(params["wq"]).astype(bf16)
    wv = group_heads(params["wv"]).astype(bf16)
    bk = group_heads(params["bk"])
    bq = group_heads(params["bq"])
    bv = group_heads(params["bv"])
    wc = params["wc"].reshape(n_groups, pg, H).astype(bf16)
    bc, g1, be1 = params["bc"], params["g1"], params["be1"]

    xb = x.astype(bf16)                            # cast once, reused per head
    idx = jnp.arange(S, dtype=jnp.int32)
    mask = jnp.where(idx[None, :] > idx[:, None], -jnp.inf, 0.0).astype(f32)

    # --- row tile over score rows: largest divisor of S whose step fits ---
    def attn_step_bytes(tr):
        return int(2 * S * H * 2                  # xb bf16 (2 buffers)
                   + 2 * tr * H * 4               # x row tile f32 (2 buffers)
                   + 2 * 4 * H * pg * 2           # wk/wq/wv/wc bf16 (2 buffers)
                   + 2 * tr * S * 4               # mask tile (2 buffers)
                   + 2 * tr * H * 4               # y out (2 buffers)
                   + tr * H * 4                   # acc scratch
                   + (tr + 2 * S) * pg * 6        # k/q/v f32 + bf16 copies
                   + 3 * tr * S * 4               # live score/exp/p slabs
                   + (2 << 20))

    tr = None
    for cand in (512, 256, 128, 64, 32, 16, 8):
        if cand <= S and S % cand == 0 and attn_step_bytes(cand) <= 0.7 * budget:
            tr = cand
            break
    if tr is None:
        divs = _divisor_tiles(S, (8, 16, 32, 64, 128, 256, 512))
        tr = divs[0] if divs else S
    n_rt = S // tr

    inv_scale = float(1.0 / math.sqrt(d_k))
    kernel = functools.partial(_attention_kernel, group=group, d_k=d_k,
                               inv_scale=inv_scale)

    P = num_head * d_k
    attn_flops = int(2 * B * S * H * P              # k projection
                     + 4 * B * n_rt * S * H * P     # q/v projections (per row tile)
                     + 4 * B * num_head * S * S * d_k   # scores + PV
                     + 2 * B * S * P * H)           # condense
    attn_trans = int(B * num_head * S * S)
    attn_bytes = int(6 * B * S * H                  # x f32 + bf16 in
                     + 4 * B * S * H                # y out
                     + 8 * num_head * H * d_k       # weights (bf16) + condense
                     + 4 * S * S                    # mask
                     + 4 * (3 * num_head * d_k + 3 * H))
    attn_vmem = min(max(attn_step_bytes(tr), 32 << 20), budget)

    y = pl.pallas_call(
        kernel,
        out_shape=jax.ShapeDtypeStruct((B, S, H), f32),
        grid=(B, n_rt, n_groups),
        in_specs=[
            pl.BlockSpec((1, S, H), lambda b, r, g: (b, 0, 0)),    # xb (bf16, full seq)
            pl.BlockSpec((1, tr, H), lambda b, r, g: (b, r, 0)),   # x row tile (f32)
            pl.BlockSpec((1, H, pg), lambda b, r, g: (g, 0, 0)),   # wk group
            pl.BlockSpec((1, 1, pg), lambda b, r, g: (g, 0, 0)),   # bk
            pl.BlockSpec((1, H, pg), lambda b, r, g: (g, 0, 0)),   # wq
            pl.BlockSpec((1, 1, pg), lambda b, r, g: (g, 0, 0)),   # bq
            pl.BlockSpec((1, H, pg), lambda b, r, g: (g, 0, 0)),   # wv
            pl.BlockSpec((1, 1, pg), lambda b, r, g: (g, 0, 0)),   # bv
            pl.BlockSpec((1, pg, H), lambda b, r, g: (g, 0, 0)),   # wc group
            pl.BlockSpec((1, H), lambda b, r, g: (0, 0)),          # bc
            pl.BlockSpec((1, H), lambda b, r, g: (0, 0)),          # g1
            pl.BlockSpec((1, H), lambda b, r, g: (0, 0)),          # be1
            pl.BlockSpec((tr, S), lambda b, r, g: (r, 0)),         # additive causal mask
        ],
        out_specs=pl.BlockSpec((1, tr, H), lambda b, r, g: (b, r, 0)),
        scratch_shapes=[pltpu.VMEM((tr, H), f32)],
        compiler_params=pltpu.CompilerParams(
            dimension_semantics=("parallel", "parallel", "arbitrary"),
            vmem_limit_bytes=attn_vmem),
        cost_estimate=pl.CostEstimate(flops=attn_flops,
                                      transcendentals=attn_trans,
                                      bytes_accessed=attn_bytes),
    )(xb, x, wk, bk, wq, bq, wv, bv, wc, bc, g1, be1, mask)

    # --- feed-forward on flattened rows (batch folded into sublanes) ---
    R = B * S
    y2 = y.reshape(R, H)
    w1 = params["w1"].astype(bf16)
    w2 = params["w2"].astype(bf16)
    b1, b2, g2, be2 = params["b1"], params["b2"], params["g2"], params["be2"]

    tf = 512 if FF_HIDDEN % 512 == 0 else 128

    def ffn_step_bytes(trf):
        return int(5 * trf * H * 4                # y in (2 buf) + out (2 buf) + acc
                   + trf * tf * 4                 # ReLU intermediate
                   + 4 * H * tf * 2               # w1 + w2 bf16, double-buffered
                   + (2 << 20))

    trf = None
    for cand in (512, 256, 128, 64, 32, 16, 8):
        if cand <= R and R % cand == 0 and ffn_step_bytes(cand) <= 0.6 * budget:
            trf = cand
            break
    if trf is None:
        divs = _divisor_tiles(R, (8, 16, 32, 64, 128, 256, 512))
        trf = divs[0] if divs else R

    ffn_flops = int(4 * R * H * FF_HIDDEN)
    ffn_bytes = int(8 * R * H + 4 * H * FF_HIDDEN + 4 * (FF_HIDDEN + 3 * H))
    ffn_vmem = min(max(ffn_step_bytes(trf), 32 << 20), budget)

    out2 = pl.pallas_call(
        _ffn_kernel,
        out_shape=jax.ShapeDtypeStruct((R, H), f32),
        grid=(R // trf, FF_HIDDEN // tf),
        in_specs=[
            pl.BlockSpec((trf, H), lambda r, f: (r, 0)),   # y rows
            pl.BlockSpec((H, tf), lambda r, f: (0, f)),    # w1 (tiled over FF)
            pl.BlockSpec((1, tf), lambda r, f: (0, f)),    # b1
            pl.BlockSpec((tf, H), lambda r, f: (f, 0)),    # w2 (tiled over FF)
            pl.BlockSpec((1, H), lambda r, f: (0, 0)),     # b2
            pl.BlockSpec((1, H), lambda r, f: (0, 0)),     # g2
            pl.BlockSpec((1, H), lambda r, f: (0, 0)),     # be2
        ],
        out_specs=pl.BlockSpec((trf, H), lambda r, f: (r, 0)),
        scratch_shapes=[pltpu.VMEM((trf, H), f32)],
        compiler_params=pltpu.CompilerParams(
            dimension_semantics=("parallel", "arbitrary"),
            vmem_limit_bytes=ffn_vmem),
        cost_estimate=pl.CostEstimate(flops=ffn_flops, transcendentals=0,
                                      bytes_accessed=ffn_bytes),
    )(y2, w1, b1, w2, b2, g2, be2)

    return out2.reshape(B, S, H)


if __name__ == "__main__":
    batch, seq, hidden, num_head = 2, 8, 32, 4
    key = jax.random.PRNGKey(0)
    k_x, k_p = jax.random.split(key)

    x = jax.random.normal(k_x, (batch, seq, hidden), jnp.float32)
    params = make_params(k_p, hidden, num_head)

    out = transform_layer(x, params, num_head)
    out = jax.block_until_ready(out)

    assert out.shape == (batch, seq, hidden), out.shape
    assert bool(jnp.all(jnp.isfinite(out))), "non-finite output"
    print("KERNEL_OK")
</pallas_src>

<mosaic_0001>
module attributes {stable_mosaic.version = 11 : i64} {
  func.func @_attention_kernel(%arg0: i32, %arg1: i32, %arg2: i32, %arg3: memref<1x8x32xbf16, #tpu.memory_space<vmem>>, %arg4: memref<1x8x32xf32, #tpu.memory_space<vmem>>, %arg5: memref<1x32x32xbf16, #tpu.memory_space<vmem>>, %arg6: memref<1x1x32xf32, #tpu.memory_space<vmem>>, %arg7: memref<1x32x32xbf16, #tpu.memory_space<vmem>>, %arg8: memref<1x1x32xf32, #tpu.memory_space<vmem>>, %arg9: memref<1x32x32xbf16, #tpu.memory_space<vmem>>, %arg10: memref<1x1x32xf32, #tpu.memory_space<vmem>>, %arg11: memref<1x32x32xbf16, #tpu.memory_space<vmem>>, %arg12: memref<1x32xf32, #tpu.memory_space<vmem>>, %arg13: memref<1x32xf32, #tpu.memory_space<vmem>>, %arg14: memref<1x32xf32, #tpu.memory_space<vmem>>, %arg15: memref<8x8xf32, #tpu.memory_space<vmem>>, %arg16: memref<1x8x32xf32, #tpu.memory_space<vmem>>, %arg17: memref<8x32xf32, #tpu.memory_space<vmem>>) attributes {dimension_semantics = [#tpu.dimension_semantics<parallel>, #tpu.dimension_semantics<parallel>, #tpu.dimension_semantics<arbitrary>], iteration_bounds = array<i64: 2, 1, 1>, scalar_prefetch = 0 : i64, scratch_operands = 1 : i64, tpu.core_type = #tpu.core_type<tc>, window_params = [{transform_indices = @transform_0, window_bounds = array<i64: 1, 8, 32>}, {transform_indices = @transform_1, window_bounds = array<i64: 1, 8, 32>}, {transform_indices = @transform_2, window_bounds = array<i64: 1, 32, 32>}, {transform_indices = @transform_3, window_bounds = array<i64: 1, 1, 32>}, {transform_indices = @transform_4, window_bounds = array<i64: 1, 32, 32>}, {transform_indices = @transform_5, window_bounds = array<i64: 1, 1, 32>}, {transform_indices = @transform_6, window_bounds = array<i64: 1, 32, 32>}, {transform_indices = @transform_7, window_bounds = array<i64: 1, 1, 32>}, {transform_indices = @transform_8, window_bounds = array<i64: 1, 32, 32>}, {pipeline_mode = #tpu.pipeline_mode<synchronous>, transform_indices = @transform_9, window_bounds = array<i64: 1, 32>}, {pipeline_mode = #tpu.pipeline_mode<synchronous>, transform_indices = @transform_10, window_bounds = array<i64: 1, 32>}, {pipeline_mode = #tpu.pipeline_mode<synchronous>, transform_indices = @transform_11, window_bounds = array<i64: 1, 32>}, {transform_indices = @transform_12, window_bounds = array<i64: 8, 8>}, {transform_indices = @transform_13, window_bounds = array<i64: 1, 8, 32>}]} {
    %c0_i32 = arith.constant 0 : i32
    %0 = arith.cmpi eq, %arg2, %c0_i32 : i32
    %1 = arith.extui %0 : i1 to i32
    %c0_i32_0 = arith.constant 0 : i32
    %2 = arith.cmpi ne, %1, %c0_i32_0 : i32
    scf.if %2 {
      %cst_58 = arith.constant 0.000000e+00 : f32
      %127 = vector.broadcast %cst_58 : f32 to vector<8x32xf32>
      %c0_59 = arith.constant 0 : index
      %c0_60 = arith.constant 0 : index
      %128 = vector.load %arg17[%c0_59, %c0_60] : memref<8x32xf32, #tpu.memory_space<vmem>>, vector<8x32xf32>
      tpu.vector_store %arg17[%c0_59, %c0_60], %127 {strides = array<i32>} : memref<8x32xf32, #tpu.memory_space<vmem>>, vector<8x32xf32>,
    } else {
    }
    %c0 = arith.constant 0 : index
    %c0_1 = arith.constant 0 : index
    %c0_2 = arith.constant 0 : index
    %3 = vector.load %arg3[%c0, %c0_1, %c0_2] : memref<1x8x32xbf16, #tpu.memory_space<vmem>>, vector<1x8x32xbf16>
    %4 = vector.shape_cast %3 : vector<1x8x32xbf16> to vector<8x32xbf16>
    %c0_3 = arith.constant 0 : index
    %c0_4 = arith.constant 0 : index
    %c0_5 = arith.constant 0 : index
    %5 = vector.load %arg4[%c0_3, %c0_4, %c0_5] : memref<1x8x32xf32, #tpu.memory_space<vmem>>, vector<1x8x32xf32>
    %6 = vector.shape_cast %5 : vector<1x8x32xf32> to vector<8x32xf32>
    %7 = arith.truncf %6 : vector<8x32xf32> to vector<8x32xbf16>
    %c0_6 = arith.constant 0 : index
    %c0_7 = arith.constant 0 : index
    %8 = vector.load %arg15[%c0_6, %c0_7] : memref<8x8xf32, #tpu.memory_space<vmem>>, vector<8x8xf32>
    %c0_8 = arith.constant 0 : index
    %c0_9 = arith.constant 0 : index
    %c0_10 = arith.constant 0 : index
    %9 = vector.load %arg5[%c0_8, %c0_9, %c0_10] : memref<1x32x32xbf16, #tpu.memory_space<vmem>>, vector<1x32x32xbf16>
    %10 = vector.shape_cast %9 : vector<1x32x32xbf16> to vector<32x32xbf16>
    %cst = arith.constant dense<0.000000e+00> : vector<8x32xf32>
    %11 = tpu.matmul %7, %10, %cst {dimension_numbers = #tpu.dot_dimension_numbers<[1], [0], [0], [1], [0, 0, 1, 1], [], []>} : vector<8x32xbf16>, vector<32x32xbf16>, vector<8x32xf32> -> vector<8x32xf32>
    %c0_11 = arith.constant 0 : index
    %c0_12 = arith.constant 0 : index
    %c0_13 = arith.constant 0 : index
    %12 = vector.load %arg6[%c0_11, %c0_12, %c0_13] : memref<1x1x32xf32, #tpu.memory_space<vmem>>, vector<1x1x32xf32>
    %13 = vector.shape_cast %12 : vector<1x1x32xf32> to vector<1x32xf32>
    %14 = vector.broadcast %13 : vector<1x32xf32> to vector<8x32xf32>
    %15 = arith.addf %11, %14 : vector<8x32xf32>
    %c0_14 = arith.constant 0 : index
    %c0_15 = arith.constant 0 : index
    %c0_16 = arith.constant 0 : index
    %16 = vector.load %arg7[%c0_14, %c0_15, %c0_16] : memref<1x32x32xbf16, #tpu.memory_space<vmem>>, vector<1x32x32xbf16>
    %17 = vector.shape_cast %16 : vector<1x32x32xbf16> to vector<32x32xbf16>
    %cst_17 = arith.constant dense<0.000000e+00> : vector<8x32xf32>
    %18 = tpu.matmul %4, %17, %cst_17 {dimension_numbers = #tpu.dot_dimension_numbers<[1], [0], [0], [1], [0, 0, 1, 1], [], []>} : vector<8x32xbf16>, vector<32x32xbf16>, vector<8x32xf32> -> vector<8x32xf32>
    %c0_18 = arith.constant 0 : index
    %c0_19 = arith.constant 0 : index
    %c0_20 = arith.constant 0 : index
    %19 = vector.load %arg8[%c0_18, %c0_19, %c0_20] : memref<1x1x32xf32, #tpu.memory_space<vmem>>, vector<1x1x32xf32>
    %20 = vector.shape_cast %19 : vector<1x1x32xf32> to vector<1x32xf32>
    %21 = vector.broadcast %20 : vector<1x32xf32> to vector<8x32xf32>
    %22 = arith.addf %18, %21 : vector<8x32xf32>
    %c0_21 = arith.constant 0 : index
    %c0_22 = arith.constant 0 : index
    %c0_23 = arith.constant 0 : index
    %23 = vector.load %arg9[%c0_21, %c0_22, %c0_23] : memref<1x32x32xbf16, #tpu.memory_space<vmem>>, vector<1x32x32xbf16>
    %24 = vector.shape_cast %23 : vector<1x32x32xbf16> to vector<32x32xbf16>
    %cst_24 = arith.constant dense<0.000000e+00> : vector<8x32xf32>
    %25 = tpu.matmul %4, %24, %cst_24 {dimension_numbers = #tpu.dot_dimension_numbers<[1], [0], [0], [1], [0, 0, 1, 1], [], []>} : vector<8x32xbf16>, vector<32x32xbf16>, vector<8x32xf32> -> vector<8x32xf32>
    %c0_25 = arith.constant 0 : index
    %c0_26 = arith.constant 0 : index
    %c0_27 = arith.constant 0 : index
    %26 = vector.load %arg10[%c0_25, %c0_26, %c0_27] : memref<1x1x32xf32, #tpu.memory_space<vmem>>, vector<1x1x32xf32>
    %27 = vector.shape_cast %26 : vector<1x1x32xf32> to vector<1x32xf32>
    %28 = vector.broadcast %27 : vector<1x32xf32> to vector<8x32xf32>
    %29 = arith.addf %25, %28 : vector<8x32xf32>
    %30 = arith.truncf %15 : vector<8x32xf32> to vector<8x32xbf16>
    %31 = arith.truncf %22 : vector<8x32xf32> to vector<8x32xbf16>
    %32 = arith.truncf %29 : vector<8x32xf32> to vector<8x32xbf16>
    %33 = vector.extract_strided_slice %30 {offsets = [0, 0], sizes = [8, 8], strides = [1, 1]} : vector<8x32xbf16> to vector<8x8xbf16>
    %34 = vector.extract_strided_slice %31 {offsets = [0, 0], sizes = [8, 8], strides = [1, 1]} : vector<8x32xbf16> to vector<8x8xbf16>
    %cst_28 = arith.constant dense<0.000000e+00> : vector<8x8xf32>
    %35 = tpu.matmul %33, %34, %cst_28 {dimension_numbers = #tpu.dot_dimension_numbers<[1], [1], [0], [0], [0, 0, 1, 0], [], []>} : vector<8x8xbf16>, vector<8x8xbf16>, vector<8x8xf32> -> vector<8x8xf32>
    %cst_29 = arith.constant 0.353553385 : f32
    %36 = vector.broadcast %cst_29 : f32 to vector<8x8xf32>
    %37 = arith.mulf %35, %36 : vector<8x8xf32>
    %38 = math.floor %37 : vector<8x8xf32>
    %39 = arith.addf %38, %8 : vector<8x8xf32>
    %cst_30 = arith.constant dense<0xFF800000> : vector<8xf32>
    %40 = vector.multi_reduction <maximumf>, %39, %cst_30 [1] : vector<8x8xf32> to vector<8xf32>
    %41 = vector.shape_cast %40 : vector<8xf32> to vector<8x1xf32>
    %42 = vector.broadcast %41 : vector<8x1xf32> to vector<8x8xf32>
    %43 = arith.subf %39, %42 : vector<8x8xf32>
    %44 = math.exp %43 : vector<8x8xf32>
    %cst_31 = arith.constant dense<0.000000e+00> : vector<8xf32>
    %45 = vector.multi_reduction <add>, %44, %cst_31 [1] : vector<8x8xf32> to vector<8xf32>
    %46 = vector.shape_cast %45 : vector<8xf32> to vector<8x1xf32>
    %47 = tpu.reciprocal %46 {approx = true} : vector<8x1xf32> -> vector<8x1xf32>
    %48 = vector.broadcast %47 : vector<8x1xf32> to vector<8x8xf32>
    %49 = arith.mulf %44, %48 : vector<8x8xf32>
    %50 = arith.truncf %49 : vector<8x8xf32> to vector<8x8xbf16>
    %51 = vector.extract_strided_slice %32 {offsets = [0, 0], sizes = [8, 8], strides = [1, 1]} : vector<8x32xbf16> to vector<8x8xbf16>
    %cst_32 = arith.constant dense<0.000000e+00> : vector<8x8xf32>
    %52 = tpu.matmul %50, %51, %cst_32 {dimension_numbers = #tpu.dot_dimension_numbers<[1], [0], [0], [1], [0, 0, 1, 1], [], []>} : vector<8x8xbf16>, vector<8x8xbf16>, vector<8x8xf32> -> vector<8x8xf32>
    %53 = arith.truncf %52 : vector<8x8xf32> to vector<8x8xbf16>
    %54 = vector.extract_strided_slice %30 {offsets = [0, 8], sizes = [8, 8], strides = [1, 1]} : vector<8x32xbf16> to vector<8x8xbf16>
    %55 = vector.extract_strided_slice %31 {offsets = [0, 8], sizes = [8, 8], strides = [1, 1]} : vector<8x32xbf16> to vector<8x8xbf16>
    %cst_33 = arith.constant dense<0.000000e+00> : vector<8x8xf32>
    %56 = tpu.matmul %54, %55, %cst_33 {dimension_numbers = #tpu.dot_dimension_numbers<[1], [1], [0], [0], [0, 0, 1, 0], [], []>} : vector<8x8xbf16>, vector<8x8xbf16>, vector<8x8xf32> -> vector<8x8xf32>
    %cst_34 = arith.constant 0.353553385 : f32
    %57 = vector.broadcast %cst_34 : f32 to vector<8x8xf32>
    %58 = arith.mulf %56, %57 : vector<8x8xf32>
    %59 = math.floor %58 : vector<8x8xf32>
    %60 = arith.addf %59, %8 : vector<8x8xf32>
    %cst_35 = arith.constant dense<0xFF800000> : vector<8xf32>
    %61 = vector.multi_reduction <maximumf>, %60, %cst_35 [1] : vector<8x8xf32> to vector<8xf32>
    %62 = vector.shape_cast %61 : vector<8xf32> to vector<8x1xf32>
    %63 = vector.broadcast %62 : vector<8x1xf32> to vector<8x8xf32>
    %64 = arith.subf %60, %63 : vector<8x8xf32>
    %65 = math.exp %64 : vector<8x8xf32>
    %cst_36 = arith.constant dense<0.000000e+00> : vector<8xf32>
    %66 = vector.multi_reduction <add>, %65, %cst_36 [1] : vector<8x8xf32> to vector<8xf32>
    %67 = vector.shape_cast %66 : vector<8xf32> to vector<8x1xf32>
    %68 = tpu.reciprocal %67 {approx = true} : vector<8x1xf32> -> vector<8x1xf32>
    %69 = vector.broadcast %68 : vector<8x1xf32> to vector<8x8xf32>
    %70 = arith.mulf %65, %69 : vector<8x8xf32>
    %71 = arith.truncf %70 : vector<8x8xf32> to vector<8x8xbf16>
    %72 = vector.extract_strided_slice %32 {offsets = [0, 8], sizes = [8, 8], strides = [1, 1]} : vector<8x32xbf16> to vector<8x8xbf16>
    %cst_37 = arith.constant dense<0.000000e+00> : vector<8x8xf32>
    %73 = tpu.matmul %71, %72, %cst_37 {dimension_numbers = #tpu.dot_dimension_numbers<[1], [0], [0], [1], [0, 0, 1, 1], [], []>} : vector<8x8xbf16>, vector<8x8xbf16>, vector<8x8xf32> -> vector<8x8xf32>
    %74 = arith.truncf %73 : vector<8x8xf32> to vector<8x8xbf16>
    %75 = vector.extract_strided_slice %30 {offsets = [0, 16], sizes = [8, 8], strides = [1, 1]} : vector<8x32xbf16> to vector<8x8xbf16>
    %76 = vector.extract_strided_slice %31 {offsets = [0, 16], sizes = [8, 8], strides = [1, 1]} : vector<8x32xbf16> to vector<8x8xbf16>
    %cst_38 = arith.constant dense<0.000000e+00> : vector<8x8xf32>
    %77 = tpu.matmul %75, %76, %cst_38 {dimension_numbers = #tpu.dot_dimension_numbers<[1], [1], [0], [0], [0, 0, 1, 0], [], []>} : vector<8x8xbf16>, vector<8x8xbf16>, vector<8x8xf32> -> vector<8x8xf32>
    %cst_39 = arith.constant 0.353553385 : f32
    %78 = vector.broadcast %cst_39 : f32 to vector<8x8xf32>
    %79 = arith.mulf %77, %78 : vector<8x8xf32>
    %80 = math.floor %79 : vector<8x8xf32>
    %81 = arith.addf %80, %8 : vector<8x8xf32>
    %cst_40 = arith.constant dense<0xFF800000> : vector<8xf32>
    %82 = vector.multi_reduction <maximumf>, %81, %cst_40 [1] : vector<8x8xf32> to vector<8xf32>
    %83 = vector.shape_cast %82 : vector<8xf32> to vector<8x1xf32>
    %84 = vector.broadcast %83 : vector<8x1xf32> to vector<8x8xf32>
    %85 = arith.subf %81, %84 : vector<8x8xf32>
    %86 = math.exp %85 : vector<8x8xf32>
    %cst_41 = arith.constant dense<0.000000e+00> : vector<8xf32>
    %87 = vector.multi_reduction <add>, %86, %cst_41 [1] : vector<8x8xf32> to vector<8xf32>
    %88 = vector.shape_cast %87 : vector<8xf32> to vector<8x1xf32>
    %89 = tpu.reciprocal %88 {approx = true} : vector<8x1xf32> -> vector<8x1xf32>
    %90 = vector.broadcast %89 : vector<8x1xf32> to vector<8x8xf32>
    %91 = arith.mulf %86, %90 : vector<8x8xf32>
    %92 = arith.truncf %91 : vector<8x8xf32> to vector<8x8xbf16>
    %93 = vector.extract_strided_slice %32 {offsets = [0, 16], sizes = [8, 8], strides = [1, 1]} : vector<8x32xbf16> to vector<8x8xbf16>
    %cst_42 = arith.constant dense<0.000000e+00> : vector<8x8xf32>
    %94 = tpu.matmul %92, %93, %cst_42 {dimension_numbers = #tpu.dot_dimension_numbers<[1], [0], [0], [1], [0, 0, 1, 1], [], []>} : vector<8x8xbf16>, vector<8x8xbf16>, vector<8x8xf32> -> vector<8x8xf32>
    %95 = arith.truncf %94 : vector<8x8xf32> to vector<8x8xbf16>
    %96 = vector.extract_strided_slice %30 {offsets = [0, 24], sizes = [8, 8], strides = [1, 1]} : vector<8x32xbf16> to vector<8x8xbf16>
    %97 = vector.extract_strided_slice %31 {offsets = [0, 24], sizes = [8, 8], strides = [1, 1]} : vector<8x32xbf16> to vector<8x8xbf16>
    %cst_43 = arith.constant dense<0.000000e+00> : vector<8x8xf32>
    %98 = tpu.matmul %96, %97, %cst_43 {dimension_numbers = #tpu.dot_dimension_numbers<[1], [1], [0], [0], [0, 0, 1, 0], [], []>} : vector<8x8xbf16>, vector<8x8xbf16>, vector<8x8xf32> -> vector<8x8xf32>
    %cst_44 = arith.constant 0.353553385 : f32
    %99 = vector.broadcast %cst_44 : f32 to vector<8x8xf32>
    %100 = arith.mulf %98, %99 : vector<8x8xf32>
    %101 = math.floor %100 : vector<8x8xf32>
    %102 = arith.addf %101, %8 : vector<8x8xf32>
    %cst_45 = arith.constant dense<0xFF800000> : vector<8xf32>
    %103 = vector.multi_reduction <maximumf>, %102, %cst_45 [1] : vector<8x8xf32> to vector<8xf32>
    %104 = vector.shape_cast %103 : vector<8xf32> to vector<8x1xf32>
    %105 = vector.broadcast %104 : vector<8x1xf32> to vector<8x8xf32>
    %106 = arith.subf %102, %105 : vector<8x8xf32>
    %107 = math.exp %106 : vector<8x8xf32>
    %cst_46 = arith.constant dense<0.000000e+00> : vector<8xf32>
    %108 = vector.multi_reduction <add>, %107, %cst_46 [1] : vector<8x8xf32> to vector<8xf32>
    %109 = vector.shape_cast %108 : vector<8xf32> to vector<8x1xf32>
    %110 = tpu.reciprocal %109 {approx = true} : vector<8x1xf32> -> vector<8x1xf32>
    %111 = vector.broadcast %110 : vector<8x1xf32> to vector<8x8xf32>
    %112 = arith.mulf %107, %111 : vector<8x8xf32>
    %113 = arith.truncf %112 : vector<8x8xf32> to vector<8x8xbf16>
    %114 = vector.extract_strided_slice %32 {offsets = [0, 24], sizes = [8, 8], strides = [1, 1]} : vector<8x32xbf16> to vector<8x8xbf16>
    %cst_47 = arith.constant dense<0.000000e+00> : vector<8x8xf32>
    %115 = tpu.matmul %113, %114, %cst_47 {dimension_numbers = #tpu.dot_dimension_numbers<[1], [0], [0], [1], [0, 0, 1, 1], [], []>} : vector<8x8xbf16>, vector<8x8xbf16>, vector<8x8xf32> -> vector<8x8xf32>
    %116 = arith.truncf %115 : vector<8x8xf32> to vector<8x8xbf16>
    %117 = tpu.concatenate %53, %74, %95, %116 in 1 : vector<8x8xbf16>, vector<8x8xbf16>, vector<8x8xbf16>, vector<8x8xbf16> -> vector<8x32xbf16>
    %c0_48 = arith.constant 0 : index
    %c0_49 = arith.constant 0 : index
    %118 = vector.load %arg17[%c0_48, %c0_49] : memref<8x32xf32, #tpu.memory_space<vmem>>, vector<8x32xf32>
    %c0_50 = arith.constant 0 : index
    %c0_51 = arith.constant 0 : index
    %c0_52 = arith.constant 0 : index
    %119 = vector.load %arg11[%c0_50, %c0_51, %c0_52] : memref<1x32x32xbf16, #tpu.memory_space<vmem>>, vector<1x32x32xbf16>
    %120 = vector.shape_cast %119 : vector<1x32x32xbf16> to vector<32x32xbf16>
    %cst_53 = arith.constant dense<0.000000e+00> : vector<8x32xf32>
    %121 = tpu.matmul %117, %120, %cst_53 {dimension_numbers = #tpu.dot_dimension_numbers<[1], [0], [0], [1], [0, 0, 1, 1], [], []>} : vector<8x32xbf16>, vector<32x32xbf16>, vector<8x32xf32> -> vector<8x32xf32>
    %122 = arith.addf %118, %121 : vector<8x32xf32>
    %c0_54 = arith.constant 0 : index
    %c0_55 = arith.constant 0 : index
    %123 = vector.load %arg17[%c0_54, %c0_55] : memref<8x32xf32, #tpu.memory_space<vmem>>, vector<8x32xf32>
    tpu.vector_store %arg17[%c0_54, %c0_55], %122 {strides = array<i32>} : memref<8x32xf32, #tpu.memory_space<vmem>>, vector<8x32xf32>,
    %c0_i32_56 = arith.constant 0 : i32
    %124 = arith.cmpi eq, %arg2, %c0_i32_56 : i32
    %125 = arith.extui %124 : i1 to i32
    %c0_i32_57 = arith.constant 0 : i32
    %126 = arith.cmpi ne, %125, %c0_i32_57 : i32
    scf.if %126 {
      %c0_58 = arith.constant 0 : index
      %c0_59 = arith.constant 0 : index
      %127 = vector.load %arg17[%c0_58, %c0_59] : memref<8x32xf32, #tpu.memory_space<vmem>>, vector<8x32xf32>
      %c0_60 = arith.constant 0 : index
      %c0_61 = arith.constant 0 : index
      %128 = vector.load %arg12[%c0_60, %c0_61] : memref<1x32xf32, #tpu.memory_space<vmem>>, vector<1x32xf32>
      %129 = vector.broadcast %128 : vector<1x32xf32> to vector<8x32xf32>
      %130 = arith.addf %127, %129 : vector<8x32xf32>
      %131 = arith.addf %6, %130 : vector<8x32xf32>
      %c0_62 = arith.constant 0 : index
      %c0_63 = arith.constant 0 : index
      %132 = vector.load %arg13[%c0_62, %c0_63] : memref<1x32xf32, #tpu.memory_space<vmem>>, vector<1x32xf32>
      %c0_64 = arith.constant 0 : index
      %c0_65 = arith.constant 0 : index
      %133 = vector.load %arg14[%c0_64, %c0_65] : memref<1x32xf32, #tpu.memory_space<vmem>>, vector<1x32xf32>
      %cst_66 = arith.constant dense<0.000000e+00> : vector<8xf32>
      %134 = vector.multi_reduction <add>, %131, %cst_66 [1] : vector<8x32xf32> to vector<8xf32>
      %135 = vector.shape_cast %134 : vector<8xf32> to vector<8x1xf32>
      %cst_67 = arith.constant 3.200000e+01 : f32
      %136 = vector.broadcast %cst_67 : f32 to vector<8x1xf32>
      %137 = arith.divf %135, %136 : vector<8x1xf32>
      %138 = vector.broadcast %137 : vector<8x1xf32> to vector<8x32xf32>
      %139 = arith.subf %131, %138 : vector<8x32xf32>
      %140 = arith.mulf %139, %139 : vector<8x32xf32>
      %cst_68 = arith.constant dense<0.000000e+00> : vector<8xf32>
      %141 = vector.multi_reduction <add>, %140, %cst_68 [1] : vector<8x32xf32> to vector<8xf32>
      %142 = vector.shape_cast %141 : vector<8xf32> to vector<8x1xf32>
      %cst_69 = arith.constant 3.200000e+01 : f32
      %143 = vector.broadcast %cst_69 : f32 to vector<8x1xf32>
      %144 = arith.divf %142, %143 : vector<8x1xf32>
      %145 = vector.broadcast %137 : vector<8x1xf32> to vector<8x32xf32>
      %146 = arith.subf %131, %145 : vector<8x32xf32>
      %cst_70 = arith.constant 9.99999974E-6 : f32
      %147 = vector.broadcast %cst_70 : f32 to vector<8x1xf32>
      %148 = arith.addf %144, %147 : vector<8x1xf32>
      %149 = math.rsqrt %148 : vector<8x1xf32>
      %150 = vector.broadcast %149 : vector<8x1xf32> to vector<8x32xf32>
      %151 = arith.mulf %146, %150 : vector<8x32xf32>
      %152 = vector.broadcast %132 : vector<1x32xf32> to vector<8x32xf32>
      %153 = arith.mulf %151, %152 : vector<8x32xf32>
      %154 = vector.broadcast %133 : vector<1x32xf32> to vector<8x32xf32>
      %155 = arith.addf %153, %154 : vector<8x32xf32>
      %c0_71 = arith.constant 0 : index
      %c0_72 = arith.constant 0 : index
      %c0_73 = arith.constant 0 : index
      %156 = vector.load %arg16[%c0_71, %c0_72, %c0_73] : memref<1x8x32xf32, #tpu.memory_space<vmem>>, vector<1x8x32xf32>
      %157 = vector.shape_cast %156 : vector<1x8x32xf32> to vector<8x32xf32>
      %158 = vector.shape_cast %155 : vector<8x32xf32> to vector<1x8x32xf32>
      tpu.vector_store %arg16[%c0_71, %c0_72, %c0_73], %158 {strides = array<i32>} : memref<1x8x32xf32, #tpu.memory_space<vmem>>, vector<1x8x32xf32>,
    } else {
    }
    return
  }
  func.func @transform_0(%arg0: i32, %arg1: i32, %arg2: i32) -> (i32, i32, i32) {
    %c0_i32 = arith.constant 0 : i32
    %c0_i32_0 = arith.constant 0 : i32
    %c0_i32_1 = arith.constant 0 : i32
    return %arg0, %c0_i32, %c0_i32_0 : i32, i32, i32
  }
  func.func @transform_1(%arg0: i32, %arg1: i32, %arg2: i32) -> (i32, i32, i32) {
    %c0_i32 = arith.constant 0 : i32
    %c0_i32_0 = arith.constant 0 : i32
    return %arg0, %arg1, %c0_i32 : i32, i32, i32
  }
  func.func @transform_2(%arg0: i32, %arg1: i32, %arg2: i32) -> (i32, i32, i32) {
    %c0_i32 = arith.constant 0 : i32
    %c0_i32_0 = arith.constant 0 : i32
    %c0_i32_1 = arith.constant 0 : i32
    return %arg2, %c0_i32, %c0_i32_0 : i32, i32, i32
  }
  func.func @transform_3(%arg0: i32, %arg1: i32, %arg2: i32) -> (i32, i32, i32) {
    %c0_i32 = arith.constant 0 : i32
    %c0_i32_0 = arith.constant 0 : i32
    %c0_i32_1 = arith.constant 0 : i32
    return %arg2, %c0_i32, %c0_i32_0 : i32, i32, i32
  }
  func.func @transform_4(%arg0: i32, %arg1: i32, %arg2: i32) -> (i32, i32, i32) {
    %c0_i32 = arith.constant 0 : i32
    %c0_i32_0 = arith.constant 0 : i32
    %c0_i32_1 = arith.constant 0 : i32
    return %arg2, %c0_i32, %c0_i32_0 : i32, i32, i32
  }
  func.func @transform_5(%arg0: i32, %arg1: i32, %arg2: i32) -> (i32, i32, i32) {
    %c0_i32 = arith.constant 0 : i32
    %c0_i32_0 = arith.constant 0 : i32
    %c0_i32_1 = arith.constant 0 : i32
    return %arg2, %c0_i32, %c0_i32_0 : i32, i32, i32
  }
  func.func @transform_6(%arg0: i32, %arg1: i32, %arg2: i32) -> (i32, i32, i32) {
    %c0_i32 = arith.constant 0 : i32
    %c0_i32_0 = arith.constant 0 : i32
    %c0_i32_1 = arith.constant 0 : i32
    return %arg2, %c0_i32, %c0_i32_0 : i32, i32, i32
  }
  func.func @transform_7(%arg0: i32, %arg1: i32, %arg2: i32) -> (i32, i32, i32) {
    %c0_i32 = arith.constant 0 : i32
    %c0_i32_0 = arith.constant 0 : i32
    %c0_i32_1 = arith.constant 0 : i32
    return %arg2, %c0_i32, %c0_i32_0 : i32, i32, i32
  }
  func.func @transform_8(%arg0: i32, %arg1: i32, %arg2: i32) -> (i32, i32, i32) {
    %c0_i32 = arith.constant 0 : i32
    %c0_i32_0 = arith.constant 0 : i32
    %c0_i32_1 = arith.constant 0 : i32
    return %arg2, %c0_i32, %c0_i32_0 : i32, i32, i32
  }
  func.func @transform_9(%arg0: i32, %arg1: i32, %arg2: i32) -> (i32, i32) {
    %c0_i32 = arith.constant 0 : i32
    %c0_i32_0 = arith.constant 0 : i32
    %c0_i32_1 = arith.constant 0 : i32
    return %c0_i32, %c0_i32_0 : i32, i32
  }
  func.func @transform_10(%arg0: i32, %arg1: i32, %arg2: i32) -> (i32, i32) {
    %c0_i32 = arith.constant 0 : i32
    %c0_i32_0 = arith.constant 0 : i32
    %c0_i32_1 = arith.constant 0 : i32
    return %c0_i32, %c0_i32_0 : i32, i32
  }
  func.func @transform_11(%arg0: i32, %arg1: i32, %arg2: i32) -> (i32, i32) {
    %c0_i32 = arith.constant 0 : i32
    %c0_i32_0 = arith.constant 0 : i32
    %c0_i32_1 = arith.constant 0 : i32
    return %c0_i32, %c0_i32_0 : i32, i32
  }
  func.func @transform_12(%arg0: i32, %arg1: i32, %arg2: i32) -> (i32, i32) {
    %c0_i32 = arith.constant 0 : i32
    %c0_i32_0 = arith.constant 0 : i32
    return %arg1, %c0_i32 : i32, i32
  }
  func.func @transform_13(%arg0: i32, %arg1: i32, %arg2: i32) -> (i32, i32, i32) {
    %c0_i32 = arith.constant 0 : i32
    %c0_i32_0 = arith.constant 0 : i32
    return %arg0, %arg1, %c0_i32 : i32, i32, i32
  }
}

</mosaic_0001>

<llo_original>
// kernel: tpu_custom_call.1
$region0: #{tpu_custom_call.1}
  #allocation0 [shape = 'u32[]', space=smem, size = 0x4, offset = 0x4, fixed_abs, tag = 'smem constant byte address 0x4 - core index']
  #allocation1 [shape = 'u32[144,128]{1,0:T(1,128)}', space=vmem, size = 0x12000, scoped, tag = 'internal scratch']
  #allocation2 [shape = 'f32[8,32]{1,0:T(8,128)}', space=vmem, size = 0x1000, scoped, tag = 'scratch operand']
  %s0 = inlined_call_operand.hbm [shape: bf16[2,8,32], index: 0, kind: input, shape index: {}]
  %s1 = inlined_call_operand.hbm [shape: f32[2,8,32], index: 1, kind: input, shape index: {}]
  %s2 = inlined_call_operand.hbm [shape: bf16[1,32,32], index: 2, kind: input, shape index: {}]
  %s3 = inlined_call_operand.vmem [shape: f32[1,1,32], index: 3, kind: input, shape index: {}]
  %s4 = inlined_call_operand.hbm [shape: bf16[1,32,32], index: 4, kind: input, shape index: {}]
  %s5 = inlined_call_operand.vmem [shape: f32[1,1,32], index: 5, kind: input, shape index: {}]
  %s6 = inlined_call_operand.vmem [shape: bf16[1,32,32], index: 6, kind: input, shape index: {}]
  %s7 = inlined_call_operand.hbm [shape: f32[1,1,32], index: 7, kind: input, shape index: {}]
  %s8 = inlined_call_operand.hbm [shape: bf16[1,32,32], index: 8, kind: input, shape index: {}]
  %s9 = inlined_call_operand.vmem [shape: f32[1,32], index: 9, kind: input, shape index: {}]
  %s10 = inlined_call_operand.vmem [shape: f32[1,32], index: 10, kind: input, shape index: {}]
  %s11 = inlined_call_operand.vmem [shape: f32[1,32], index: 11, kind: input, shape index: {}]
  %s12 = inlined_call_operand.vmem [shape: f32[8,8], index: 12, kind: input, shape index: {}]
  %s13 = inlined_call_operand.hbm [shape: f32[2,8,32], index: 13, kind: output, shape index: {}]
  %s14 = sld [smem:[#allocation0]]
  $region117: #{tpu_custom_call.1} parent=0
    _
  %s16 = ssub.s32 1, %s14
  %s17 = scalar_select 0, %s16, %s14
  $region1: #{tpu_custom_call.1} parent=0
    #allocation3 [shape = 'u8[4096]{0}', space=vmem, size = 0x1000, scoped, tag = 'input window, operand 0']
    #allocation4 [shape = 's32[2]{0}', space=sflag, size = 0x8, scoped, tag = 'scoped memory for tpu_custom_call.1']
    #allocation5 [shape = 's32[2]{0}', space=sflag, size = 0x8, scoped, tag = 'scoped memory for tpu_custom_call.1']
    #allocation6 [shape = 'u8[8192]{0}', space=vmem, size = 0x2000, scoped, tag = 'input window, operand 1']
    #allocation7 [shape = 's32[2]{0}', space=sflag, size = 0x8, scoped, tag = 'scoped memory for tpu_custom_call.1']
    #allocation8 [shape = 'u8[8192]{0}', space=vmem, size = 0x2000, scoped, tag = 'input window, operand 2, single buffered']
    #allocation9 [shape = 'u8[8192]{0}', space=vmem, size = 0x2000, scoped, tag = 'input window, operand 4, single buffered']
    #allocation10 [shape = 's32[1]{0}', space=sflag, size = 0x4, scoped, tag = 'scoped memory for tpu_custom_call.1']
    #allocation11 [shape = 'u8[512]{0}', space=vmem, size = 0x400, scoped, tag = 'input window, operand 7, single buffered']
    #allocation12 [shape = 'u8[8192]{0}', space=vmem, size = 0x2000, scoped, tag = 'input window, operand 8, single buffered']
    #allocation13 [shape = 's32[1]{0}', space=sflag, size = 0x4, scoped, tag = 'scoped memory for tpu_custom_call.1']
    #allocation14 [shape = 'u8[8192]{0}', space=vmem, size = 0x2000, scoped, tag = 'output window, operand 0']
    %18 = vsyncpa [#allocation4], 0
    %s19 = scalar_lea.sflag [#allocation4], 1
    %20 = vsyncpa %s19, 0
    %21 = vsyncpa [#allocation7], 0
    %s22 = scalar_lea.sflag [#allocation7], 1
    %23 = vsyncpa %s22, 0
    %24 = vsyncpa [#allocation10], 0
    %25 = vsyncpa [#allocation13], 0
    %26 = vsyncpa [#allocation5], 0
    %s27 = scalar_lea.sflag [#allocation5], 1
    %28 = vsyncpa %s27, 0
    loop: start=0, step=1, limit=4
    $region2: #{tpu_custom_call.1} parent=1 // loop_pre_header
      _
    $region3: #{tpu_custom_call.1} parent=1 // loop_header
      %s30 = sphi 0, %s34
      %p31 = scmp.ge.s32.totalorder %s30, 4
      %s37 = sphi 0, %s56
      %s38 = sphi 0, %s52
      %s39 = sphi 0, %s48
      %s40 = sphi 0, %s37
      %s41 = sphi 0, %s38
      %s42 = sphi 0, %s39
      %s43 = sphi 0, %s40
      %s44 = sphi 0, %s41
      %s45 = sphi 0, %s42
      %s59 = sphi 0, %s61
      %s62 = sphi 0, %s59
      %s63 = sphi 0, %s62
      %s79 = sphi 0, %s63
      %s87 = sphi 0, %s89
      %s90 = sphi 0, %s87
      %s91 = sphi 0, %s90
      %s107 = sphi 0, %s91
      %s113 = sphi 0, %s115
      %s116 = sphi 0, %s113
      %s117 = sphi 0, %s116
      %s133 = sphi 0, %s117
      %s139 = sphi 0, %s141
      %s142 = sphi 0, %s139
      %s143 = sphi 0, %s142
      %s159 = sphi 0, %s143
      %s165 = sphi 0, %s167
      %s168 = sphi 0, %s165
      %s169 = sphi 0, %s168
      %s185 = sphi 0, %s169
      %s191 = sphi 0, %s193
      %s194 = sphi 0, %s191
      %s195 = sphi 0, %s194
      %s211 = sphi 0, %s195
      %s217 = sphi 0, %s219
      %s220 = sphi 0, %s217
      %s221 = sphi 0, %s220
      %s237 = sphi 0, %s221
      %s243 = sphi 0, %s245
      %s246 = sphi 0, %s243
      %s247 = sphi 0, %s246
      %s263 = sphi 0, %s247
      %s269 = sphi 0, %s271
      %s272 = sphi 0, %s269
      %s273 = sphi 0, %s272
      %s289 = sphi 0, %s273
      %s293 = sphi 0, %s293
      %s295 = sphi 0, %s293
      %s296 = sphi 0, %s295
      %s310 = sphi 0, %s296
      %s314 = sphi 0, %s314
      %s316 = sphi 0, %s314
      %s317 = sphi 0, %s316
      %s331 = sphi 0, %s317
      %s335 = sphi 0, %s335
      %s337 = sphi 0, %s335
      %s338 = sphi 0, %s337
      %s352 = sphi 0, %s338
      %s358 = sphi 0, %s360
      %s361 = sphi 0, %s358
      %s362 = sphi 0, %s361
      %s378 = sphi 0, %s362
      %s386 = sphi 0, %s388
      %s389 = sphi 0, %s386
      %s390 = sphi 0, %s389
      %s406 = sphi 0, %s390
    $region4: #{tpu_custom_call.1} parent=1 // loop_header_branch
      %33 = sbr.rel (%p31) target = $region8
    $region5: #{tpu_custom_call.1} parent=1 // loop_body
      %s35 = ssub.s32 %s30, 1
      %s36 = ssub.s32 %s30, 2
      %s46 = sadd.s32 1, %s39
      %p47 = scmp.ge.s32.totalorder %s46, 1
      %s48 = scalar_select %p47, 0, %s46
      %s49 = sadd.s32 1, %s38
      %s50 = scalar_select %p47, %s49, %s38
      %p51 = scmp.ge.s32.totalorder %s50, 1
      %s52 = scalar_select %p51, 0, %s50
      %s53 = sadd.s32 1, %s37
      %s54 = scalar_select %p51, %s53, %s37
      %p55 = scmp.ge.s32.totalorder %s54, 2
      %s56 = scalar_select %p55, 0, %s54
      %s57 = ssub.s32 %s37, %s56
      %p58 = scmp.eq.s32.totalorder %s57, 0
      %s60 = sadd.s32 %s59, 1
      %s61 = scalar_select %p58, %s59, %s60
      %p64 = pneg %p58
      %p65 = scmp.eq.s32.totalorder %s30, 1
      %p66 = por %p64, %p65
      %p67 = scmp.ne.s32.totalorder %s59, %s62
      %p68 = scmp.eq.s32.totalorder %s30, 0
      %p69 = por %p67, %p68
      %p70 = scmp.ne.s32.totalorder %s59, %s62
      %p71 = scmp.eq.s32.totalorder %s35, 1
      %p72 = por %p70, %p71
      %p73 = scmp.ne.s32.totalorder %s62, %s63
      %p74 = scmp.eq.s32.totalorder %s35, 0
      %p75 = por %p73, %p74
      %p76 = scmp.ne.s32.totalorder %s62, %s63
      %p77 = scmp.eq.s32.totalorder %s36, 1
      %p78 = por %p76, %p77
      %p80 = scmp.ne.s32.totalorder %s63, %s79
      %p81 = scmp.eq.s32.totalorder %s36, 0
      %p82 = por %p80, %p81
      %s83 = ssub.s32 %s37, %s56
      %s84 = ssub.s32 %s38, %s52
      %s85 = sor.u32 %s83, %s84
      %p86 = scmp.eq.s32.totalorder %s85, 0
      %s88 = sadd.s32 %s87, 1
      %s89 = scalar_select %p86, %s87, %s88
      %p92 = pneg %p86
      %p93 = scmp.eq.s32.totalorder %s30, 1
      %p94 = por %p92, %p93
      %p95 = scmp.ne.s32.totalorder %s87, %s90
      %p96 = scmp.eq.s32.totalorder %s30, 0
      %p97 = por %p95, %p96
      %p98 = scmp.ne.s32.totalorder %s87, %s90
      %p99 = scmp.eq.s32.totalorder %s35, 1
      %p100 = por %p98, %p99
      %p101 = scmp.ne.s32.totalorder %s90, %s91
      %p102 = scmp.eq.s32.totalorder %s35, 0
      %p103 = por %p101, %p102
      %p104 = scmp.ne.s32.totalorder %s90, %s91
      %p105 = scmp.eq.s32.totalorder %s36, 1
      %p106 = por %p104, %p105
      %p108 = scmp.ne.s32.totalorder %s91, %s107
      %p109 = scmp.eq.s32.totalorder %s36, 0
      %p110 = por %p108, %p109
      %s111 = ssub.s32 %s39, %s48
      %p112 = scmp.eq.s32.totalorder %s111, 0
      %s114 = sadd.s32 %s113, 1
      %s115 = scalar_select %p112, %s113, %s114
      %p118 = pneg %p112
      %p119 = scmp.eq.s32.totalorder %s30, 1
      %p120 = por %p118, %p119
      %p121 = scmp.ne.s32.totalorder %s113, %s116
      %p122 = scmp.eq.s32.totalorder %s30, 0
      %p123 = por %p121, %p122
      %p124 = scmp.ne.s32.totalorder %s113, %s116
      %p125 = scmp.eq.s32.totalorder %s35, 1
      %p126 = por %p124, %p125
      %p127 = scmp.ne.s32.totalorder %s116, %s117
      %p128 = scmp.eq.s32.totalorder %s35, 0
      %p129 = por %p127, %p128
      %p130 = scmp.ne.s32.totalorder %s116, %s117
      %p131 = scmp.eq.s32.totalorder %s36, 1
      %p132 = por %p130, %p131
      %p134 = scmp.ne.s32.totalorder %s117, %s133
      %p135 = scmp.eq.s32.totalorder %s36, 0
      %p136 = por %p134, %p135
      %s137 = ssub.s32 %s39, %s48
      %p138 = scmp.eq.s32.totalorder %s137, 0
      %s140 = sadd.s32 %s139, 1
      %s141 = scalar_select %p138, %s139, %s140
      %p144 = pneg %p138
      %p145 = scmp.eq.s32.totalorder %s30, 1
      %p146 = por %p144, %p145
      %p147 = scmp.ne.s32.totalorder %s139, %s142
      %p148 = scmp.eq.s32.totalorder %s30, 0
      %p149 = por %p147, %p148
      %p150 = scmp.ne.s32.totalorder %s139, %s142
      %p151 = scmp.eq.s32.totalorder %s35, 1
      %p152 = por %p150, %p151
      %p153 = scmp.ne.s32.totalorder %s142, %s143
      %p154 = scmp.eq.s32.totalorder %s35, 0
      %p155 = por %p153, %p154
      %p156 = scmp.ne.s32.totalorder %s142, %s143
      %p157 = scmp.eq.s32.totalorder %s36, 1
      %p158 = por %p156, %p157
      %p160 = scmp.ne.s32.totalorder %s143, %s159
      %p161 = scmp.eq.s32.totalorder %s36, 0
      %p162 = por %p160, %p161
      %s163 = ssub.s32 %s39, %s48
      %p164 = scmp.eq.s32.totalorder %s163, 0
      %s166 = sadd.s32 %s165, 1
      %s167 = scalar_select %p164, %s165, %s166
      %p170 = pneg %p164
      %p171 = scmp.eq.s32.totalorder %s30, 1
      %p172 = por %p170, %p171
      %p173 = scmp.ne.s32.totalorder %s165, %s168
      %p174 = scmp.eq.s32.totalorder %s30, 0
      %p175 = por %p173, %p174
      %p176 = scmp.ne.s32.totalorder %s165, %s168
      %p177 = scmp.eq.s32.totalorder %s35, 1
      %p178 = por %p176, %p177
      %p179 = scmp.ne.s32.totalorder %s168, %s169
      %p180 = scmp.eq.s32.totalorder %s35, 0
      %p181 = por %p179, %p180
      %p182 = scmp.ne.s32.totalorder %s168, %s169
      %p183 = scmp.eq.s32.totalorder %s36, 1
      %p184 = por %p182, %p183
      %p186 = scmp.ne.s32.totalorder %s169, %s185
      %p187 = scmp.eq.s32.totalorder %s36, 0
      %p188 = por %p186, %p187
      %s189 = ssub.s32 %s39, %s48
      %p190 = scmp.eq.s32.totalorder %s189, 0
      %s192 = sadd.s32 %s191, 1
      %s193 = scalar_select %p190, %s191, %s192
      %p196 = pneg %p190
      %p197 = scmp.eq.s32.totalorder %s30, 1
      %p198 = por %p196, %p197
      %p199 = scmp.ne.s32.totalorder %s191, %s194
      %p200 = scmp.eq.s32.totalorder %s30, 0
      %p201 = por %p199, %p200
      %p202 = scmp.ne.s32.totalorder %s191, %s194
      %p203 = scmp.eq.s32.totalorder %s35, 1
      %p204 = por %p202, %p203
      %p205 = scmp.ne.s32.totalorder %s194, %s195
      %p206 = scmp.eq.s32.totalorder %s35, 0
      %p207 = por %p205, %p206
      %p208 = scmp.ne.s32.totalorder %s194, %s195
      %p209 = scmp.eq.s32.totalorder %s36, 1
      %p210 = por %p208, %p209
      %p212 = scmp.ne.s32.totalorder %s195, %s211
      %p213 = scmp.eq.s32.totalorder %s36, 0
      %p214 = por %p212, %p213
      %s215 = ssub.s32 %s39, %s48
      %p216 = scmp.eq.s32.totalorder %s215, 0
      %s218 = sadd.s32 %s217, 1
      %s219 = scalar_select %p216, %s217, %s218
      %p222 = pneg %p216
      %p223 = scmp.eq.s32.totalorder %s30, 1
      %p224 = por %p222, %p223
      %p225 = scmp.ne.s32.totalorder %s217, %s220
      %p226 = scmp.eq.s32.totalorder %s30, 0
      %p227 = por %p225, %p226
      %p228 = scmp.ne.s32.totalorder %s217, %s220
      %p229 = scmp.eq.s32.totalorder %s35, 1
      %p230 = por %p228, %p229
      %p231 = scmp.ne.s32.totalorder %s220, %s221
      %p232 = scmp.eq.s32.totalorder %s35, 0
      %p233 = por %p231, %p232
      %p234 = scmp.ne.s32.totalorder %s220, %s221
      %p235 = scmp.eq.s32.totalorder %s36, 1
      %p236 = por %p234, %p235
      %p238 = scmp.ne.s32.totalorder %s221, %s237
      %p239 = scmp.eq.s32.totalorder %s36, 0
      %p240 = por %p238, %p239
      %s241 = ssub.s32 %s39, %s48
      %p242 = scmp.eq.s32.totalorder %s241, 0
      %s244 = sadd.s32 %s243, 1
      %s245 = scalar_select %p242, %s243, %s244
      %p248 = pneg %p242
      %p249 = scmp.eq.s32.totalorder %s30, 1
      %p250 = por %p248, %p249
      %p251 = scmp.ne.s32.totalorder %s243, %s246
      %p252 = scmp.eq.s32.totalorder %s30, 0
      %p253 = por %p251, %p252
      %p254 = scmp.ne.s32.totalorder %s243, %s246
      %p255 = scmp.eq.s32.totalorder %s35, 1
      %p256 = por %p254, %p255
      %p257 = scmp.ne.s32.totalorder %s246, %s247
      %p258 = scmp.eq.s32.totalorder %s35, 0
      %p259 = por %p257, %p258
      %p260 = scmp.ne.s32.totalorder %s246, %s247
      %p261 = scmp.eq.s32.totalorder %s36, 1
      %p262 = por %p260, %p261
      %p264 = scmp.ne.s32.totalorder %s247, %s263
      %p265 = scmp.eq.s32.totalorder %s36, 0
      %p266 = por %p264, %p265
      %s267 = ssub.s32 %s39, %s48
      %p268 = scmp.eq.s32.totalorder %s267, 0
      %s270 = sadd.s32 %s269, 1
      %s271 = scalar_select %p268, %s269, %s270
      %p274 = pneg %p268
      %p275 = scmp.eq.s32.totalorder %s30, 1
      %p276 = por %p274, %p275
      %p277 = scmp.ne.s32.totalorder %s269, %s272
      %p278 = scmp.eq.s32.totalorder %s30, 0
      %p279 = por %p277, %p278
      %p280 = scmp.ne.s32.totalorder %s269, %s272
      %p281 = scmp.eq.s32.totalorder %s35, 1
      %p282 = por %p280, %p281
      %p283 = scmp.ne.s32.totalorder %s272, %s273
      %p284 = scmp.eq.s32.totalorder %s35, 0
      %p285 = por %p283, %p284
      %p286 = scmp.ne.s32.totalorder %s272, %s273
      %p287 = scmp.eq.s32.totalorder %s36, 1
      %p288 = por %p286, %p287
      %p290 = scmp.ne.s32.totalorder %s273, %s289
      %p291 = scmp.eq.s32.totalorder %s36, 0
      %p292 = por %p290, %p291
      %s294 = sadd.s32 %s293, 1
      %p297 = scmp.eq.s32.totalorder %s30, 1
      %p298 = scmp.ne.s32.totalorder %s293, %s295
      %p299 = scmp.eq.s32.totalorder %s30, 0
      %p300 = por %p298, %p299
      %p301 = scmp.ne.s32.totalorder %s293, %s295
      %p302 = scmp.eq.s32.totalorder %s35, 1
      %p303 = por %p301, %p302
      %p304 = scmp.ne.s32.totalorder %s295, %s296
      %p305 = scmp.eq.s32.totalorder %s35, 0
      %p306 = por %p304, %p305
      %p307 = scmp.ne.s32.totalorder %s295, %s296
      %p308 = scmp.eq.s32.totalorder %s36, 1
      %p309 = por %p307, %p308
      %p311 = scmp.ne.s32.totalorder %s296, %s310
      %p312 = scmp.eq.s32.totalorder %s36, 0
      %p313 = por %p311, %p312
      %s315 = sadd.s32 %s314, 1
      %p318 = scmp.eq.s32.totalorder %s30, 1
      %p319 = scmp.ne.s32.totalorder %s314, %s316
      %p320 = scmp.eq.s32.totalorder %s30, 0
      %p321 = por %p319, %p320
      %p322 = scmp.ne.s32.totalorder %s314, %s316
      %p323 = scmp.eq.s32.totalorder %s35, 1
      %p324 = por %p322, %p323
      %p325 = scmp.ne.s32.totalorder %s316, %s317
      %p326 = scmp.eq.s32.totalorder %s35, 0
      %p327 = por %p325, %p326
      %p328 = scmp.ne.s32.totalorder %s316, %s317
      %p329 = scmp.eq.s32.totalorder %s36, 1
      %p330 = por %p328, %p329
      %p332 = scmp.ne.s32.totalorder %s317, %s331
      %p333 = scmp.eq.s32.totalorder %s36, 0
      %p334 = por %p332, %p333
      %s336 = sadd.s32 %s335, 1
      %p339 = scmp.eq.s32.totalorder %s30, 1
      %p340 = scmp.ne.s32.totalorder %s335, %s337
      %p341 = scmp.eq.s32.totalorder %s30, 0
      %p342 = por %p340, %p341
      %p343 = scmp.ne.s32.totalorder %s335, %s337
      %p344 = scmp.eq.s32.totalorder %s35, 1
      %p345 = por %p343, %p344
      %p346 = scmp.ne.s32.totalorder %s337, %s338
      %p347 = scmp.eq.s32.totalorder %s35, 0
      %p348 = por %p346, %p347
      %p349 = scmp.ne.s32.totalorder %s337, %s338
      %p350 = scmp.eq.s32.totalorder %s36, 1
      %p351 = por %p349, %p350
      %p353 = scmp.ne.s32.totalorder %s338, %s352
      %p354 = scmp.eq.s32.totalorder %s36, 0
      %p355 = por %p353, %p354
      %s356 = ssub.s32 %s38, %s52
      %p357 = scmp.eq.s32.totalorder %s356, 0
      %s359 = sadd.s32 %s358, 1
      %s360 = scalar_select %p357, %s358, %s359
      %p363 = pneg %p357
      %p364 = scmp.eq.s32.totalorder %s30, 1
      %p365 = por %p363, %p364
      %p366 = scmp.ne.s32.totalorder %s358, %s361
      %p367 = scmp.eq.s32.totalorder %s30, 0
      %p368 = por %p366, %p367
      %p369 = scmp.ne.s32.totalorder %s358, %s361
      %p370 = scmp.eq.s32.totalorder %s35, 1
      %p371 = por %p369, %p370
      %p372 = scmp.ne.s32.totalorder %s361, %s362
      %p373 = scmp.eq.s32.totalorder %s35, 0
      %p374 = por %p372, %p373
      %p375 = scmp.ne.s32.totalorder %s361, %s362
      %p376 = scmp.eq.s32.totalorder %s36, 1
      %p377 = por %p375, %p376
      %p379 = scmp.ne.s32.totalorder %s362, %s378
      %p380 = scmp.eq.s32.totalorder %s36, 0
      %p381 = por %p379, %p380
      %s382 = ssub.s32 %s37, %s56
      %s383 = ssub.s32 %s38, %s52
      %s384 = sor.u32 %s382, %s383
      %p385 = scmp.eq.s32.totalorder %s384, 0
      %s387 = sadd.s32 %s386, 1
      %s388 = scalar_select %p385, %s386, %s387
      %p391 = pneg %p385
      %p392 = scmp.eq.s32.totalorder %s30, 1
      %p393 = por %p391, %p392
      %p394 = scmp.ne.s32.totalorder %s386, %s389
      %p395 = scmp.eq.s32.totalorder %s30, 0
      %p396 = por %p394, %p395
      %p397 = scmp.ne.s32.totalorder %s386, %s389
      %p398 = scmp.eq.s32.totalorder %s35, 1
      %p399 = por %p397, %p398
      %p400 = scmp.ne.s32.totalorder %s389, %s390
      %p401 = scmp.eq.s32.totalorder %s35, 0
      %p402 = por %p400, %p401
      %p403 = scmp.ne.s32.totalorder %s389, %s390
      %p404 = scmp.eq.s32.totalorder %s36, 1
      %p405 = por %p403, %p404
      %p407 = scmp.ne.s32.totalorder %s390, %s406
      %p408 = scmp.eq.s32.totalorder %s36, 0
      %p409 = por %p407, %p408
      %p410 = scmp.le.s32.totalorder 1, %s30
      %p411 = scmp.lt.s32.totalorder %s30, 3
      %p412 = pnand %p410, %p411
      %p413 = pneg %p412
      // Predicated region
      $region9: #{tpu_custom_call.1} parent=5 // pred_check
        _
      $region10: #{tpu_custom_call.1} parent=5 // pred_check_branch
        %415 = sbr.rel (%p412) target = $region12
      $region11: #{tpu_custom_call.1} parent=5 // pred_region
        %s416 = ssub.s32 %s30, 1
        // Predicated region
        $region13: #{tpu_custom_call.1} parent=11 // pred_check
          %p417 = pneg %p129
        $region14: #{tpu_custom_call.1} parent=11 // pred_check_branch
          %419 = sbr.rel (%p417) target = $region16
        $region15: #{tpu_custom_call.1} parent=11 // pred_region
          %s421 = ssub.s32 256, 256
          %422 = vsyncadd [#allocation7], %s421
          %s423 = smul.addr %s42, 4
          %s424 = smul.addr %s423, 64
          %s425 = scalar_lea.hbm %s2, %s424
          %s426 = sshll.u32 [#allocation8], 4
          %s427 = int_to_ptr.vmem [resolvable:$true] %s426
          %432 = dma.hbm_to_vmem [thread:$0]  %s425, 256, %s427, [#allocation7], 64, 64, 4
        $region16: #{tpu_custom_call.1} parent=11 // pred_fallthru
          _
        // Predicated region
        $region17: #{tpu_custom_call.1} parent=11 // pred_check
          %p433 = pneg %p155
        $region18: #{tpu_custom_call.1} parent=11 // pred_check_branch
          %435 = sbr.rel (%p433) target = $region20
        $region19: #{tpu_custom_call.1} parent=11 // pred_region
          %p436 = scmp.lt.s32.totalorder %s42, 0
          %s437 = scalar_select %p436, %s42, 0
          %s438 = scalar_lea.vmem %s3, %s437
        $region20: #{tpu_custom_call.1} parent=11 // pred_fallthru
          _
        // Predicated region
        $region21: #{tpu_custom_call.1} parent=11 // pred_check
          %p439 = pneg %p181
        $region22: #{tpu_custom_call.1} parent=11 // pred_check_branch
          %441 = sbr.rel (%p439) target = $region24
        $region23: #{tpu_custom_call.1} parent=11 // pred_region
          %s443 = ssub.s32 256, 256
          %444 = vsyncadd [#allocation10], %s443
          %s445 = smul.addr %s42, 4
          %s446 = smul.addr %s445, 64
          %s447 = scalar_lea.hbm %s4, %s446
          %s448 = sshll.u32 [#allocation9], 4
          %s449 = int_to_ptr.vmem [resolvable:$true] %s448
          %454 = dma.hbm_to_vmem [thread:$0]  %s447, 256, %s449, [#allocation10], 64, 64, 4
        $region24: #{tpu_custom_call.1} parent=11 // pred_fallthru
          _
        // Predicated region
        $region25: #{tpu_custom_call.1} parent=11 // pred_check
          %p455 = pneg %p207
        $region26: #{tpu_custom_call.1} parent=11 // pred_check_branch
          %457 = sbr.rel (%p455) target = $region28
        $region27: #{tpu_custom_call.1} parent=11 // pred_region
          %p458 = scmp.lt.s32.totalorder %s42, 0
          %s459 = scalar_select %p458, %s42, 0
          %s460 = scalar_lea.vmem %s5, %s459
        $region28: #{tpu_custom_call.1} parent=11 // pred_fallthru
          _
        // Predicated region
        $region29: #{tpu_custom_call.1} parent=11 // pred_check
          %p461 = pneg %p233
        $region30: #{tpu_custom_call.1} parent=11 // pred_check_branch
          %463 = sbr.rel (%p461) target = $region32
        $region31: #{tpu_custom_call.1} parent=11 // pred_region
          %p464 = scmp.lt.s32.totalorder %s42, 0
          %s465 = scalar_select %p464, %s42, 0
          %s466 = smul.addr %s465, 4
          %s467 = smul.addr %s466, 4
          %s468 = scalar_lea.vmem %s6, %s467
        $region32: #{tpu_custom_call.1} parent=11 // pred_fallthru
          _
        // Predicated region
        $region33: #{tpu_custom_call.1} parent=11 // pred_check
          %p469 = pneg %p259
        $region34: #{tpu_custom_call.1} parent=11 // pred_check_branch
          %471 = sbr.rel (%p469) target = $region36
        $region35: #{tpu_custom_call.1} parent=11 // pred_region
          %s473 = ssub.s32 16, 16
          %474 = vsyncadd [#allocation10], %s473
          %s475 = smul.addr %s42, 16
          %s476 = scalar_lea.hbm %s7, %s475
          %s478 = sshll.u32 [#allocation11], 4
          %s479 = int_to_ptr.vmem [resolvable:$true] %s478
          %481 = dma.hbm_to_vmem [thread:$0]  %s476, 16, %s479, [#allocation10]
        $region36: #{tpu_custom_call.1} parent=11 // pred_fallthru
          _
        // Predicated region
        $region37: #{tpu_custom_call.1} parent=11 // pred_check
          %p482 = pneg %p285
        $region38: #{tpu_custom_call.1} parent=11 // pred_check_branch
          %484 = sbr.rel (%p482) target = $region40
        $region39: #{tpu_custom_call.1} parent=11 // pred_region
          %s486 = ssub.s32 256, 256
          %487 = vsyncadd [#allocation13], %s486
          %s488 = smul.addr %s42, 4
          %s489 = smul.addr %s488, 64
          %s490 = scalar_lea.hbm %s8, %s489
          %s491 = sshll.u32 [#allocation12], 4
          %s492 = int_to_ptr.vmem [resolvable:$true] %s491
          %497 = dma.hbm_to_vmem [thread:$0]  %s490, 256, %s492, [#allocation13], 64, 64, 4
        $region40: #{tpu_custom_call.1} parent=11 // pred_fallthru
          _
        // Predicated region
        $region41: #{tpu_custom_call.1} parent=11 // pred_check
          %p498 = pneg %p306
        $region42: #{tpu_custom_call.1} parent=11 // pred_check_branch
          %500 = sbr.rel (%p498) target = $region44
        $region43: #{tpu_custom_call.1} parent=11 // pred_region
          _
        $region44: #{tpu_custom_call.1} parent=11 // pred_fallthru
          _
        // Predicated region
        $region45: #{tpu_custom_call.1} parent=11 // pred_check
          %p501 = pneg %p327
        $region46: #{tpu_custom_call.1} parent=11 // pred_check_branch
          %503 = sbr.rel (%p501) target = $region48
        $region47: #{tpu_custom_call.1} parent=11 // pred_region
          _
        $region48: #{tpu_custom_call.1} parent=11 // pred_fallthru
          _
        // Predicated region
        $region49: #{tpu_custom_call.1} parent=11 // pred_check
          %p504 = pneg %p348
        $region50: #{tpu_custom_call.1} parent=11 // pred_check_branch
          %506 = sbr.rel (%p504) target = $region52
        $region51: #{tpu_custom_call.1} parent=11 // pred_region
          _
        $region52: #{tpu_custom_call.1} parent=11 // pred_fallthru
          _
        // Predicated region
        $region53: #{tpu_custom_call.1} parent=11 // pred_check
          %p507 = pneg %p374
        $region54: #{tpu_custom_call.1} parent=11 // pred_check_branch
          %509 = sbr.rel (%p507) target = $region56
        $region55: #{tpu_custom_call.1} parent=11 // pred_region
          %p510 = scmp.lt.s32.totalorder %s41, 0
          %s511 = scalar_select %p510, %s41, 0
          %s512 = smul.addr %s511, 8
          %s513 = scalar_lea.vmem %s12, %s512
        $region56: #{tpu_custom_call.1} parent=11 // pred_fallthru
          _
      $region12: #{tpu_custom_call.1} parent=5 // pred_fallthru
        _
      %p514 = scmp.lt.s32.totalorder %s30, 2
      // Predicated region
      $region57: #{tpu_custom_call.1} parent=5 // pred_check
        %p515 = pneg %p514
      $region58: #{tpu_custom_call.1} parent=5 // pred_check_branch
        %517 = sbr.rel (%p515) target = $region60
      $region59: #{tpu_custom_call.1} parent=5 // pred_region
        // Predicated region
        $region61: #{tpu_custom_call.1} parent=59 // pred_check
          %p518 = pneg %p69
        $region62: #{tpu_custom_call.1} parent=59 // pred_check_branch
          %520 = sbr.rel (%p518) target = $region64
        $region63: #{tpu_custom_call.1} parent=59 // pred_region
          %s521 = sand.u32 %s59, 1
          %s522 = scalar_lea.sflag [#allocation4], %s521
          %s523 = sand.u32 %s59, 1
          %s524 = smul.addr %s523, 4
          %s525 = scalar_lea.vmem [#allocation3], %s524
          %s527 = ssub.s32 64, 64
          %528 = vsyncadd %s522, %s527
          %s529 = smul.addr %s37, 64
          %s530 = scalar_lea.hbm %s0, %s529
          %s532 = sshll.u32 %s525, 4
          %s533 = int_to_ptr.vmem [resolvable:$true] %s532
          %535 = dma.hbm_to_vmem [thread:$0]  %s530, 64, %s533, %s522
        $region64: #{tpu_custom_call.1} parent=59 // pred_fallthru
          _
        // Predicated region
        $region65: #{tpu_custom_call.1} parent=59 // pred_check
          %p536 = pneg %p97
        $region66: #{tpu_custom_call.1} parent=59 // pred_check_branch
          %538 = sbr.rel (%p536) target = $region68
        $region67: #{tpu_custom_call.1} parent=59 // pred_region
          %s539 = sand.u32 %s30, 1
          %s540 = scalar_lea.sflag [#allocation7], %s539
          %s541 = sand.u32 %s87, 1
          %s542 = smul.addr %s541, 8
          %s543 = scalar_lea.vmem [#allocation6], %s542
          %s545 = ssub.s32 128, 128
          %546 = vsyncadd %s540, %s545
          %s547 = sadd.s32 %s38, %s37
          %s548 = smul.addr %s547, 128
          %s549 = scalar_lea.hbm %s1, %s548
          %s551 = sshll.u32 %s543, 4
          %s552 = int_to_ptr.vmem [resolvable:$true] %s551
          %554 = dma.hbm_to_vmem [thread:$0]  %s549, 128, %s552, %s540
        $region68: #{tpu_custom_call.1} parent=59 // pred_fallthru
          _
      $region60: #{tpu_custom_call.1} parent=5 // pred_fallthru
        _
      %p555 = scmp.le.s32.totalorder 1, %s30
      %p556 = scmp.lt.s32.totalorder %s30, 3
      %p557 = pnand %p555, %p556
      %p558 = pneg %p557
      // Predicated region
      $region69: #{tpu_custom_call.1} parent=5 // pred_check
        _
      $region70: #{tpu_custom_call.1} parent=5 // pred_check_branch
        %560 = sbr.rel (%p557) target = $region72
      $region71: #{tpu_custom_call.1} parent=5 // pred_region
        %s561 = ssub.s32 %s30, 1
        %s562 = sand.u32 %s62, 1
        %s563 = scalar_lea.sflag [#allocation4], %s562
        %s564 = sand.u32 %s62, 1
        %s565 = smul.addr %s564, 4
        %s566 = scalar_lea.vmem [#allocation3], %s565
        // Predicated region
        $region73: #{tpu_custom_call.1} parent=71 // pred_check
          %p567 = pneg %p75
        $region74: #{tpu_custom_call.1} parent=71 // pred_check_branch
          %569 = sbr.rel (%p567) target = $region76
        $region75: #{tpu_custom_call.1} parent=71 // pred_region
          %570 = dma.done %s563, 64
        $region76: #{tpu_custom_call.1} parent=71 // pred_fallthru
          _
        %s571 = sand.u32 %s35, 1
        %s572 = scalar_lea.sflag [#allocation7], %s571
        %s573 = sand.u32 %s90, 1
        %s574 = smul.addr %s573, 8
        %s575 = scalar_lea.vmem [#allocation6], %s574
        // Predicated region
        $region77: #{tpu_custom_call.1} parent=71 // pred_check
          %p576 = pneg %p103
        $region78: #{tpu_custom_call.1} parent=71 // pred_check_branch
          %578 = sbr.rel (%p576) target = $region80
        $region79: #{tpu_custom_call.1} parent=71 // pred_region
          %579 = dma.done %s572, 128
        $region80: #{tpu_custom_call.1} parent=71 // pred_fallthru
          _
        // Predicated region
        $region81: #{tpu_custom_call.1} parent=71 // pred_check
          %p580 = pneg %p129
        $region82: #{tpu_custom_call.1} parent=71 // pred_check_branch
          %582 = sbr.rel (%p580) target = $region84
        $region83: #{tpu_custom_call.1} parent=71 // pred_region
          %583 = dma.done [#allocation7], 256
        $region84: #{tpu_custom_call.1} parent=71 // pred_fallthru
          _
        // Predicated region
        $region85: #{tpu_custom_call.1} parent=71 // pred_check
          %p584 = pneg %p181
        $region86: #{tpu_custom_call.1} parent=71 // pred_check_branch
          %586 = sbr.rel (%p584) target = $region88
        $region87: #{tpu_custom_call.1} parent=71 // pred_region
          %587 = dma.done [#allocation10], 256
        $region88: #{tpu_custom_call.1} parent=71 // pred_fallthru
          _
        // Predicated region
        $region89: #{tpu_custom_call.1} parent=71 // pred_check
          %p588 = pneg %p259
        $region90: #{tpu_custom_call.1} parent=71 // pred_check_branch
          %590 = sbr.rel (%p588) target = $region92
        $region91: #{tpu_custom_call.1} parent=71 // pred_region
          %591 = dma.done [#allocation10], 16
        $region92: #{tpu_custom_call.1} parent=71 // pred_fallthru
          _
        // Predicated region
        $region93: #{tpu_custom_call.1} parent=71 // pred_check
          %p592 = pneg %p285
        $region94: #{tpu_custom_call.1} parent=71 // pred_check_branch
          %594 = sbr.rel (%p592) target = $region96
        $region95: #{tpu_custom_call.1} parent=71 // pred_region
          %595 = dma.done [#allocation13], 256
        $region96: #{tpu_custom_call.1} parent=71 // pred_fallthru
          _
        %s596 = sand.u32 %s62, 1
        %s597 = scalar_lea.sflag [#allocation4], %s596
        %s598 = sand.u32 %s62, 1
        %s599 = smul.addr %s598, 4
        %s600 = scalar_lea.vmem [#allocation3], %s599
        %p601 = pneg %p75
        %p602 = pneg %p72
        %s603 = sand.u32 %s35, 1
        %s604 = scalar_lea.sflag [#allocation7], %s603
        %s605 = sand.u32 %s90, 1
        %s606 = smul.addr %s605, 8
        %s607 = scalar_lea.vmem [#allocation6], %s606
        %p608 = pneg %p103
        %p609 = pneg %p100
        %p610 = pneg %p129
        %p611 = pneg %p126
        %p612 = scmp.lt.s32.totalorder %s42, 0
        %s613 = scalar_select %p612, %s42, 0
        %s614 = scalar_lea.vmem %s3, %s613
        %p615 = pneg %p155
        %p616 = pneg %p152
        %p617 = pneg %p181
        %p618 = pneg %p178
        %p619 = scmp.lt.s32.totalorder %s42, 0
        %s620 = scalar_select %p619, %s42, 0
        %s621 = scalar_lea.vmem %s5, %s620
        %p622 = pneg %p207
        %p623 = pneg %p204
        %p624 = scmp.lt.s32.totalorder %s42, 0
        %s625 = scalar_select %p624, %s42, 0
        %s626 = smul.addr %s625, 4
        %s627 = smul.addr %s626, 4
        %s628 = scalar_lea.vmem %s6, %s627
        %p629 = pneg %p233
        %p630 = pneg %p230
        %p631 = pneg %p259
        %p632 = pneg %p256
        %p633 = pneg %p285
        %p634 = pneg %p282
        %p635 = pneg %p306
        %p636 = pneg %p303
        %p637 = pneg %p327
        %p638 = pneg %p324
        %p639 = pneg %p348
        %p640 = pneg %p345
        %p641 = scmp.lt.s32.totalorder %s41, 0
        %s642 = scalar_select %p641, %s41, 0
        %s643 = smul.addr %s642, 8
        %s644 = scalar_lea.vmem %s12, %s643
        %p645 = pneg %p374
        %p646 = pneg %p371
        %p647 = pneg %p402
        %p648 = pneg %p399
        %s649 = sand.u32 %s389, 1
        %s650 = scalar_lea.sflag [#allocation5], %s649
        %s651 = sand.u32 %s389, 1
        %s652 = smul.addr %s651, 8
        %s653 = scalar_lea.vmem [#allocation14], %s652
        %p654 = scmp.lt.s32.totalorder %s42, 0
        %s655 = scalar_select %p654, %s42, 0
        %s656 = scalar_lea.vmem %s3, %s655
        %p657 = scmp.lt.s32.totalorder %s42, 0
        %s658 = scalar_select %p657, %s42, 0
        %s659 = scalar_lea.vmem %s5, %s658
        %p660 = scmp.lt.s32.totalorder %s42, 0
        %s661 = scalar_select %p660, %s42, 0
        %s662 = smul.addr %s661, 4
        %s663 = smul.addr %s662, 4
        %s664 = scalar_lea.vmem %s6, %s663
        %p665 = scmp.lt.s32.totalorder %s41, 0
        %s666 = scalar_select %p665, %s41, 0
        %s667 = smul.addr %s666, 8
        %s668 = scalar_lea.vmem %s12, %s667
        %p670 = scmp.eq.s32.totalorder %s42, 0
        // Predicated region
        $region97: #{tpu_custom_call.1} parent=71 // pred_check
          %p671 = pneg %p670
        $region98: #{tpu_custom_call.1} parent=71 // pred_check_branch
          %673 = sbr.rel (%p671) target = $region100
        $region99: #{tpu_custom_call.1} parent=71 // pred_region
          %vm674 = vcmask 261120
          %675 = vst.msk [vmem:[#allocation2] sm:$0xff] %vm674, 0.0
        $region100: #{tpu_custom_call.1} parent=71 // pred_fallthru
          _
        %v676 = vld [vmem:[%s566] sm:$0xf]
        %v677 = vld [vmem:[%s575] sm:$0xff]
        %v678 = vpack.c.bf16 %v677, %v677
        %v679 = vld [vmem:[%s668] sm:$0xff]
        %v680 = vld [vmem:[#allocation8] sm:$0xf]
        %v681 = vld [vmem:[#allocation8 + $0x4] sm:$0xf]
        %v682 = vld [vmem:[#allocation8 + $0x8] sm:$0xf]
        %v683 = vld [vmem:[#allocation8 + $0xc] sm:$0xf]
        %v684 = vld [vmem:[%s656] sm:$0x1]
        %v686 = vlaneseq
        %v687 = vshrl.u32 %v686, 7
        %v688 = vsub.s32 0, %v687
        %v689 = vrot.slane %v684, %v688
        %v695 = vunpack.c.l.b16 %v680
        %v696 = vunpack.c.l.b16 %v681
        %v697 = vunpack.c.l.b16 %v682
        %v698 = vunpack.c.l.b16 %v683
        %v699 = vpack.c.b16 %v696, %v695
        %v700 = vpack.c.b16 %v698, %v697
        %vm703 = vcmask 261120
        %v705 = vsel %vm703, %v678, 0
        %707 = vmatprep.subr.bf16.mxu0 0
        %708 = vmatpush1.bf16.msra.mxu0 %v699
        %709 = vmatprep.subr.bf16.mxu0 0
        %710 = vmatpush1.bf16.msra.mxu0 %v700
        %711 = vmatprep.subr.bf16.mxu0 0
        %712 = vmatpush1.bf16.msra.mxu0 0
        %713 = vmatprep.subr.bf16.mxu0 0
        %714 = vmatpush1.bf16.msra.mxu0 0
        %715 = vmatprep.subr.bf16.mxu0 0
        %716 = vmatpush1.bf16.msra.mxu0 0
        %717 = vmatprep.subr.bf16.mxu0 0
        %718 = vmatpush1.bf16.msra.mxu0 0
        %719 = vmatprep.subr.bf16.mxu0 0
        %720 = vmatpush1.bf16.msra.mxu0 0
        %721 = vmatprep.subr.bf16.mxu0 0
        %722 = vmatpush1.bf16.msra.mxu0 0
        %723 = vmatprep.subr.bf16.mxu0 0
        %724 = vmatpush1.bf16.msra.mxu0 0
        %725 = vmatprep.subr.bf16.mxu0 0
        %726 = vmatpush1.bf16.msra.mxu0 0
        %727 = vmatprep.subr.bf16.mxu0 0
        %728 = vmatpush1.bf16.msra.mxu0 0
        %729 = vmatprep.subr.bf16.mxu0 0
        %730 = vmatpush1.bf16.msra.mxu0 0
        %731 = vmatprep.subr.bf16.mxu0 0
        %732 = vmatpush1.bf16.msra.mxu0 0
        %733 = vmatprep.subr.bf16.mxu0 0
        %734 = vmatpush1.bf16.msra.mxu0 0
        %735 = vmatprep.subr.bf16.mxu0 0
        %736 = vmatpush1.bf16.msra.mxu0 0
        %737 = vmatprep.subr.bf16.mxu0 0
        %738 = vmatpush1.bf16.msra.mxu0 0
        %739 = vmatprep.mubr.bf16.mxu0 0
        %740 = vmatmul.mubr.bf16.gmra.mrb[0].mxu0 %v705
        %v741 = vpop.f32.mrb[0].mxu0
        %v742 = vadd.f32 %v689, %v741
        %v743 = vpop.f32.mrb[0].mxu0
        %v744 = vpop.f32.mrb[0].mxu0
        %v745 = vpop.f32.mrb[0].mxu0
        %746 = vdwg.mxu0
        %v747 = vld [vmem:[#allocation9] sm:$0xf]
        %v748 = vld [vmem:[#allocation9 + $0x4] sm:$0xf]
        %v749 = vld [vmem:[#allocation9 + $0x8] sm:$0xf]
        %v750 = vld [vmem:[#allocation9 + $0xc] sm:$0xf]
        %v751 = vld [vmem:[%s659] sm:$0x1]
        %v753 = vlaneseq
        %v754 = vshrl.u32 %v753, 7
        %v755 = vsub.s32 0, %v754
        %v756 = vrot.slane %v751, %v755
        %v762 = vunpack.c.l.b16 %v747
        %v763 = vunpack.c.l.b16 %v748
        %v764 = vunpack.c.l.b16 %v749
        %v765 = vunpack.c.l.b16 %v750
        %v766 = vpack.c.b16 %v763, %v762
        %v767 = vpack.c.b16 %v765, %v764
        %v771 = vsel %vm703, %v676, 0
        %773 = vmatprep.subr.bf16.mxu0 0
        %774 = vmatpush1.bf16.msra.mxu0 %v766
        %775 = vmatprep.subr.bf16.mxu0 0
        %776 = vmatpush1.bf16.msra.mxu0 %v767
        %777 = vmatprep.subr.bf16.mxu0 0
        %778 = vmatpush1.bf16.msra.mxu0 0
        %779 = vmatprep.subr.bf16.mxu0 0
        %780 = vmatpush1.bf16.msra.mxu0 0
        %781 = vmatprep.subr.bf16.mxu0 0
        %782 = vmatpush1.bf16.msra.mxu0 0
        %783 = vmatprep.subr.bf16.mxu0 0
        %784 = vmatpush1.bf16.msra.mxu0 0
        %785 = vmatprep.subr.bf16.mxu0 0
        %786 = vmatpush1.bf16.msra.mxu0 0
        %787 = vmatprep.subr.bf16.mxu0 0
        %788 = vmatpush1.bf16.msra.mxu0 0
        %789 = vmatprep.subr.bf16.mxu0 0
        %790 = vmatpush1.bf16.msra.mxu0 0
        %791 = vmatprep.subr.bf16.mxu0 0
        %792 = vmatpush1.bf16.msra.mxu0 0
        %793 = vmatprep.subr.bf16.mxu0 0
        %794 = vmatpush1.bf16.msra.mxu0 0
        %795 = vmatprep.subr.bf16.mxu0 0
        %796 = vmatpush1.bf16.msra.mxu0 0
        %797 = vmatprep.subr.bf16.mxu0 0
        %798 = vmatpush1.bf16.msra.mxu0 0
        %799 = vmatprep.subr.bf16.mxu0 0
        %800 = vmatpush1.bf16.msra.mxu0 0
        %801 = vmatprep.subr.bf16.mxu0 0
        %802 = vmatpush1.bf16.msra.mxu0 0
        %803 = vmatprep.subr.bf16.mxu0 0
        %804 = vmatpush1.bf16.msra.mxu0 0
        %805 = vmatprep.mubr.bf16.mxu0 0
        %806 = vmatmul.mubr.bf16.gmra.mrb[0].mxu0 %v771
        %v807 = vpop.f32.mrb[0].mxu0
        %v808 = vadd.f32 %v756, %v807
        %v809 = vpop.f32.mrb[0].mxu0
        %v810 = vpop.f32.mrb[0].mxu0
        %v811 = vpop.f32.mrb[0].mxu0
        %812 = vdwg.mxu0
        %v813 = vld [vmem:[%s664] sm:$0xf]
        %v814 = vld [vmem:[%s664 + $0x4] sm:$0xf]
        %v815 = vld [vmem:[%s664 + $0x8] sm:$0xf]
        %v816 = vld [vmem:[%s664 + $0xc] sm:$0xf]
        %v817 = vld [vmem:[#allocation11] sm:$0x1]
        %v819 = vlaneseq
        %v820 = vshrl.u32 %v819, 7
        %v821 = vsub.s32 0, %v820
        %v822 = vrot.slane %v817, %v821
        %v828 = vunpack.c.l.b16 %v813
        %v829 = vunpack.c.l.b16 %v814
        %v830 = vunpack.c.l.b16 %v815
        %v831 = vunpack.c.l.b16 %v816
        %v832 = vpack.c.b16 %v829, %v828
        %v833 = vpack.c.b16 %v831, %v830
        %836 = vmatprep.subr.bf16.mxu0 0
        %837 = vmatpush1.bf16.msra.mxu0 %v832
        %838 = vmatprep.subr.bf16.mxu0 0
        %839 = vmatpush1.bf16.msra.mxu0 %v833
        %840 = vmatprep.subr.bf16.mxu0 0
        %841 = vmatpush1.bf16.msra.mxu0 0
        %842 = vmatprep.subr.bf16.mxu0 0
        %843 = vmatpush1.bf16.msra.mxu0 0
        %844 = vmatprep.subr.bf16.mxu0 0
        %845 = vmatpush1.bf16.msra.mxu0 0
        %846 = vmatprep.subr.bf16.mxu0 0
        %847 = vmatpush1.bf16.msra.mxu0 0
        %848 = vmatprep.subr.bf16.mxu0 0
        %849 = vmatpush1.bf16.msra.mxu0 0
        %850 = vmatprep.subr.bf16.mxu0 0
        %851 = vmatpush1.bf16.msra.mxu0 0
        %852 = vmatprep.subr.bf16.mxu0 0
        %853 = vmatpush1.bf16.msra.mxu0 0
        %854 = vmatprep.subr.bf16.mxu0 0
        %855 = vmatpush1.bf16.msra.mxu0 0
        %856 = vmatprep.subr.bf16.mxu0 0
        %857 = vmatpush1.bf16.msra.mxu0 0
        %858 = vmatprep.subr.bf16.mxu0 0
        %859 = vmatpush1.bf16.msra.mxu0 0
        %860 = vmatprep.subr.bf16.mxu0 0
        %861 = vmatpush1.bf16.msra.mxu0 0
        %862 = vmatprep.subr.bf16.mxu0 0
        %863 = vmatpush1.bf16.msra.mxu0 0
        %864 = vmatprep.subr.bf16.mxu0 0
        %865 = vmatpush1.bf16.msra.mxu0 0
        %866 = vmatprep.subr.bf16.mxu0 0
        %867 = vmatpush1.bf16.msra.mxu0 0
        %868 = vmatprep.mubr.bf16.mxu0 0
        %869 = vmatmul.mubr.bf16.gmra.mrb[0].mxu0 %v771
        %v870 = vpop.f32.mrb[0].mxu0
        %v871 = vadd.f32 %v822, %v870
        %v872 = vpop.f32.mrb[0].mxu0
        %v873 = vpop.f32.mrb[0].mxu0
        %v874 = vpop.f32.mrb[0].mxu0
        %875 = vdwg.mxu0
        %v876 = vpack.c.bf16 %v742, %v742
        %v877 = vpack.c.bf16 %v808, %v808
        %v878 = vpack.c.bf16 %v871, %v871
        %vm879 = vcmask 64512
        %v881 = vsel %vm879, %v876, 0
        %v884 = vsel %vm879, %v877, 0
        %886 = vmatprep.subr.bf16.mxu0 0
        %887 = vmatpush1.bf16.xpose.msra.mxu0 %v884
        %888 = vmatprep.subr.bf16.mxu0 0
        %889 = vmatpush1.bf16.xpose.msra.mxu0 0
        %890 = vmatprep.subr.bf16.mxu0 0
        %891 = vmatpush1.bf16.xpose.msra.mxu0 0
        %892 = vmatprep.subr.bf16.mxu0 0
        %893 = vmatpush1.bf16.xpose.msra.mxu0 0
        %894 = vmatprep.subr.bf16.mxu0 0
        %895 = vmatpush1.bf16.xpose.msra.mxu0 0
        %896 = vmatprep.subr.bf16.mxu0 0
        %897 = vmatpush1.bf16.xpose.msra.mxu0 0
        %898 = vmatprep.subr.bf16.mxu0 0
        %899 = vmatpush1.bf16.xpose.msra.mxu0 0
        %900 = vmatprep.subr.bf16.mxu0 0
        %901 = vmatpush1.bf16.xpose.msra.mxu0 0
        %902 = vmatprep.subr.bf16.mxu0 0
        %903 = vmatpush1.bf16.xpose.msra.mxu0 0
        %904 = vmatprep.subr.bf16.mxu0 0
        %905 = vmatpush1.bf16.xpose.msra.mxu0 0
        %906 = vmatprep.subr.bf16.mxu0 0
        %907 = vmatpush1.bf16.xpose.msra.mxu0 0
        %908 = vmatprep.subr.bf16.mxu0 0
        %909 = vmatpush1.bf16.xpose.msra.mxu0 0
        %910 = vmatprep.subr.bf16.mxu0 0
        %911 = vmatpush1.bf16.xpose.msra.mxu0 0
        %912 = vmatprep.subr.bf16.mxu0 0
        %913 = vmatpush1.bf16.xpose.msra.mxu0 0
        %914 = vmatprep.subr.bf16.mxu0 0
        %915 = vmatpush1.bf16.xpose.msra.mxu0 0
        %916 = vmatprep.subr.bf16.mxu0 0
        %917 = vmatpush1.bf16.xpose.msra.mxu0 0
        %918 = vmatprep.mubr.bf16.mxu0 0
        %919 = vmatmul.mubr.bf16.gmra.mrb[0].mxu0 %v881
        %v920 = vpop.f32.mrb[0].mxu0
        %v921 = vadd.f32 0.0, %v920
        %v922 = vpop.f32.mrb[0].mxu0
        %v923 = vpop.f32.mrb[0].mxu0
        %v924 = vpop.f32.mrb[0].mxu0
        %925 = vdwg.mxu0
        %v926 = vmul.f32 %v921, 0.35355338
        %v927 = vfloor.f32 %v926
        %v928 = vadd.f32 %v927, %v679
        %v929 = vsel %vm879, %v928, -inf
        %930 = vmax.xlane.f32.xlu0 %v929
        %v931 = vpop.xlane.xlu0 %930
        %v932 = vsub.f32 %v928, %v931
        %v933 = vmul.f32 %v932, 1.442695
        %v934 = vpow.pop %v933
        %v935 = vsel %vm879, %v934, 0.0
        %936 = vadd.xlane.f32.xlu0 %v935
        %v937 = vpop.xlane.xlu0 %936
        %v938 = vrcp.pop %v937
        %v939 = vmul.f32 %v934, %v938
        %v940 = vpack.c.bf16 %v939, %v939
        %v942 = vsel %vm879, %v940, 0
        %vm944 = vcmask 1043456
        %v946 = vsel %vm944, %v878, 0
        %948 = vmatprep.subr.bf16.mxu0 0
        %949 = vmatpush1.bf16.msra.mxu0 %v946
        %950 = vmatprep.subr.bf16.mxu0 0
        %951 = vmatpush1.bf16.msra.mxu0 0
        %952 = vmatprep.subr.bf16.mxu0 0
        %953 = vmatpush1.bf16.msra.mxu0 0
        %954 = vmatprep.subr.bf16.mxu0 0
        %955 = vmatpush1.bf16.msra.mxu0 0
        %956 = vmatprep.subr.bf16.mxu0 0
        %957 = vmatpush1.bf16.msra.mxu0 0
        %958 = vmatprep.subr.bf16.mxu0 0
        %959 = vmatpush1.bf16.msra.mxu0 0
        %960 = vmatprep.subr.bf16.mxu0 0
        %961 = vmatpush1.bf16.msra.mxu0 0
        %962 = vmatprep.subr.bf16.mxu0 0
        %963 = vmatpush1.bf16.msra.mxu0 0
        %964 = vmatprep.subr.bf16.mxu0 0
        %965 = vmatpush1.bf16.msra.mxu0 0
        %966 = vmatprep.subr.bf16.mxu0 0
        %967 = vmatpush1.bf16.msra.mxu0 0
        %968 = vmatprep.subr.bf16.mxu0 0
        %969 = vmatpush1.bf16.msra.mxu0 0
        %970 = vmatprep.subr.bf16.mxu0 0
        %971 = vmatpush1.bf16.msra.mxu0 0
        %972 = vmatprep.subr.bf16.mxu0 0
        %973 = vmatpush1.bf16.msra.mxu0 0
        %974 = vmatprep.subr.bf16.mxu0 0
        %975 = vmatpush1.bf16.msra.mxu0 0
        %976 = vmatprep.subr.bf16.mxu0 0
        %977 = vmatpush1.bf16.msra.mxu0 0
        %978 = vmatprep.subr.bf16.mxu0 0
        %979 = vmatpush1.bf16.msra.mxu0 0
        %980 = vmatprep.mubr.bf16.mxu0 0
        %981 = vmatmul.mubr.bf16.gmra.mrb[0].mxu0 %v942
        %v982 = vpop.f32.mrb[0].mxu0
        %v983 = vadd.f32 0.0, %v982
        %v984 = vpop.f32.mrb[0].mxu0
        %v985 = vpop.f32.mrb[0].mxu0
        %v986 = vpop.f32.mrb[0].mxu0
        %987 = vdwg.mxu0
        %v988 = vpack.c.bf16 %v983, %v983
        %990 = vrot.lane.b32.xlu0 %v876, 120
        %v991 = vpop.permute.xlu0 %990
        %993 = vrot.lane.b32.xlu0 %v877, 120
        %v994 = vpop.permute.xlu0 %993
        %v996 = vsel %vm879, %v991, 0
        %v999 = vsel %vm879, %v994, 0
        %1001 = vmatprep.subr.bf16.mxu0 0
        %1002 = vmatpush1.bf16.xpose.msra.mxu0 %v999
        %1003 = vmatprep.subr.bf16.mxu0 0
        %1004 = vmatpush1.bf16.xpose.msra.mxu0 0
        %1005 = vmatprep.subr.bf16.mxu0 0
        %1006 = vmatpush1.bf16.xpose.msra.mxu0 0
        %1007 = vmatprep.subr.bf16.mxu0 0
        %1008 = vmatpush1.bf16.xpose.msra.mxu0 0
        %1009 = vmatprep.subr.bf16.mxu0 0
        %1010 = vmatpush1.bf16.xpose.msra.mxu0 0
        %1011 = vmatprep.subr.bf16.mxu0 0
        %1012 = vmatpush1.bf16.xpose.msra.mxu0 0
        %1013 = vmatprep.subr.bf16.mxu0 0
        %1014 = vmatpush1.bf16.xpose.msra.mxu0 0
        %1015 = vmatprep.subr.bf16.mxu0 0
        %1016 = vmatpush1.bf16.xpose.msra.mxu0 0
        %1017 = vmatprep.subr.bf16.mxu0 0
        %1018 = vmatpush1.bf16.xpose.msra.mxu0 0
        %1019 = vmatprep.subr.bf16.mxu0 0
        %1020 = vmatpush1.bf16.xpose.msra.mxu0 0
        %1021 = vmatprep.subr.bf16.mxu0 0
        %1022 = vmatpush1.bf16.xpose.msra.mxu0 0
        %1023 = vmatprep.subr.bf16.mxu0 0
        %1024 = vmatpush1.bf16.xpose.msra.mxu0 0
        %1025 = vmatprep.subr.bf16.mxu0 0
        %1026 = vmatpush1.bf16.xpose.msra.mxu0 0
        %1027 = vmatprep.subr.bf16.mxu0 0
        %1028 = vmatpush1.bf16.xpose.msra.mxu0 0
        %1029 = vmatprep.subr.bf16.mxu0 0
        %1030 = vmatpush1.bf16.xpose.msra.mxu0 0
        %1031 = vmatprep.subr.bf16.mxu0 0
        %1032 = vmatpush1.bf16.xpose.msra.mxu0 0
        %1033 = vmatprep.mubr.bf16.mxu0 0
        %1034 = vmatmul.mubr.bf16.gmra.mrb[0].mxu0 %v996
        %v1035 = vpop.f32.mrb[0].mxu0
        %v1036 = vadd.f32 0.0, %v1035
        %v1037 = vpop.f32.mrb[0].mxu0
        %v1038 = vpop.f32.mrb[0].mxu0
        %v1039 = vpop.f32.mrb[0].mxu0
        %1040 = vdwg.mxu0
        %v1041 = vmul.f32 %v1036, 0.35355338
        %v1042 = vfloor.f32 %v1041
        %v1043 = vadd.f32 %v1042, %v679
        %v1044 = vsel %vm879, %v1043, -inf
        %1045 = vmax.xlane.f32.xlu0 %v1044
        %v1046 = vpop.xlane.xlu0 %1045
        %v1047 = vsub.f32 %v1043, %v1046
        %v1048 = vmul.f32 %v1047, 1.442695
        %v1049 = vpow.pop %v1048
        %v1050 = vsel %vm879, %v1049, 0.0
        %1051 = vadd.xlane.f32.xlu0 %v1050
        %v1052 = vpop.xlane.xlu0 %1051
        %v1053 = vrcp.pop %v1052
        %v1054 = vmul.f32 %v1049, %v1053
        %v1055 = vpack.c.bf16 %v1054, %v1054
        %1057 = vrot.lane.b32.xlu0 %v878, 120
        %v1058 = vpop.permute.xlu0 %1057
        %v1060 = vsel %vm879, %v1055, 0
        %v1063 = vsel %vm944, %v1058, 0
        %1065 = vmatprep.subr.bf16.mxu0 0
        %1066 = vmatpush1.bf16.msra.mxu0 %v1063
        %1067 = vmatprep.subr.bf16.mxu0 0
        %1068 = vmatpush1.bf16.msra.mxu0 0
        %1069 = vmatprep.subr.bf16.mxu0 0
        %1070 = vmatpush1.bf16.msra.mxu0 0
        %1071 = vmatprep.subr.bf16.mxu0 0
        %1072 = vmatpush1.bf16.msra.mxu0 0
        %1073 = vmatprep.subr.bf16.mxu0 0
        %1074 = vmatpush1.bf16.msra.mxu0 0
        %1075 = vmatprep.subr.bf16.mxu0 0
        %1076 = vmatpush1.bf16.msra.mxu0 0
        %1077 = vmatprep.subr.bf16.mxu0 0
        %1078 = vmatpush1.bf16.msra.mxu0 0
        %1079 = vmatprep.subr.bf16.mxu0 0
        %1080 = vmatpush1.bf16.msra.mxu0 0
        %1081 = vmatprep.subr.bf16.mxu0 0
        %1082 = vmatpush1.bf16.msra.mxu0 0
        %1083 = vmatprep.subr.bf16.mxu0 0
        %1084 = vmatpush1.bf16.msra.mxu0 0
        %1085 = vmatprep.subr.bf16.mxu0 0
        %1086 = vmatpush1.bf16.msra.mxu0 0
        %1087 = vmatprep.subr.bf16.mxu0 0
        %1088 = vmatpush1.bf16.msra.mxu0 0
        %1089 = vmatprep.subr.bf16.mxu0 0
        %1090 = vmatpush1.bf16.msra.mxu0 0
        %1091 = vmatprep.subr.bf16.mxu0 0
        %1092 = vmatpush1.bf16.msra.mxu0 0
        %1093 = vmatprep.subr.bf16.mxu0 0
        %1094 = vmatpush1.bf16.msra.mxu0 0
        %1095 = vmatprep.subr.bf16.mxu0 0
        %1096 = vmatpush1.bf16.msra.mxu0 0
        %1097 = vmatprep.mubr.bf16.mxu0 0
        %1098 = vmatmul.mubr.bf16.gmra.mrb[0].mxu0 %v1060
        %v1099 = vpop.f32.mrb[0].mxu0
        %v1100 = vadd.f32 0.0, %v1099
        %v1101 = vpop.f32.mrb[0].mxu0
        %v1102 = vpop.f32.mrb[0].mxu0
        %v1103 = vpop.f32.mrb[0].mxu0
        %1104 = vdwg.mxu0
        %v1105 = vpack.c.bf16 %v1100, %v1100
        %1106 = vrot.lane.b32.xlu0 %v876, 112
        %v1107 = vpop.permute.xlu0 %1106
        %1108 = vrot.lane.b32.xlu0 %v877, 112
        %v1109 = vpop.permute.xlu0 %1108
        %v1111 = vsel %vm879, %v1107, 0
        %v1114 = vsel %vm879, %v1109, 0
        %1116 = vmatprep.subr.bf16.mxu0 0
        %1117 = vmatpush1.bf16.xpose.msra.mxu0 %v1114
        %1118 = vmatprep.subr.bf16.mxu0 0
        %1119 = vmatpush1.bf16.xpose.msra.mxu0 0
        %1120 = vmatprep.subr.bf16.mxu0 0
        %1121 = vmatpush1.bf16.xpose.msra.mxu0 0
        %1122 = vmatprep.subr.bf16.mxu0 0
        %1123 = vmatpush1.bf16.xpose.msra.mxu0 0
        %1124 = vmatprep.subr.bf16.mxu0 0
        %1125 = vmatpush1.bf16.xpose.msra.mxu0 0
        %1126 = vmatprep.subr.bf16.mxu0 0
        %1127 = vmatpush1.bf16.xpose.msra.mxu0 0
        %1128 = vmatprep.subr.bf16.mxu0 0
        %1129 = vmatpush1.bf16.xpose.msra.mxu0 0
        %1130 = vmatprep.subr.bf16.mxu0 0
        %1131 = vmatpush1.bf16.xpose.msra.mxu0 0
        %1132 = vmatprep.subr.bf16.mxu0 0
        %1133 = vmatpush1.bf16.xpose.msra.mxu0 0
        %1134 = vmatprep.subr.bf16.mxu0 0
        %1135 = vmatpush1.bf16.xpose.msra.mxu0 0
        %1136 = vmatprep.subr.bf16.mxu0 0
        %1137 = vmatpush1.bf16.xpose.msra.mxu0 0
        %1138 = vmatprep.subr.bf16.mxu0 0
        %1139 = vmatpush1.bf16.xpose.msra.mxu0 0
        %1140 = vmatprep.subr.bf16.mxu0 0
        %1141 = vmatpush1.bf16.xpose.msra.mxu0 0
        %1142 = vmatprep.subr.bf16.mxu0 0
        %1143 = vmatpush1.bf16.xpose.msra.mxu0 0
        %1144 = vmatprep.subr.bf16.mxu0 0
        %1145 = vmatpush1.bf16.xpose.msra.mxu0 0
        %1146 = vmatprep.subr.bf16.mxu0 0
        %1147 = vmatpush1.bf16.xpose.msra.mxu0 0
        %1148 = vmatprep.mubr.bf16.mxu0 0
        %1149 = vmatmul.mubr.bf16.gmra.mrb[0].mxu0 %v1111
        %v1150 = vpop.f32.mrb[0].mxu0
        %v1151 = vadd.f32 0.0, %v1150
        %v1152 = vpop.f32.mrb[0].mxu0
        %v1153 = vpop.f32.mrb[0].mxu0
        %v1154 = vpop.f32.mrb[0].mxu0
        %1155 = vdwg.mxu0
        %v1156 = vmul.f32 %v1151, 0.35355338
        %v1157 = vfloor.f32 %v1156
        %v1158 = vadd.f32 %v1157, %v679
        %v1159 = vsel %vm879, %v1158, -inf
        %1160 = vmax.xlane.f32.xlu0 %v1159
        %v1161 = vpop.xlane.xlu0 %1160
        %v1162 = vsub.f32 %v1158, %v1161
        %v1163 = vmul.f32 %v1162, 1.442695
        %v1164 = vpow.pop %v1163
        %v1165 = vsel %vm879, %v1164, 0.0
        %1166 = vadd.xlane.f32.xlu0 %v1165
        %v1167 = vpop.xlane.xlu0 %1166
        %v1168 = vrcp.pop %v1167
        %v1169 = vmul.f32 %v1164, %v1168
        %v1170 = vpack.c.bf16 %v1169, %v1169
        %1171 = vrot.lane.b32.xlu0 %v878, 112
        %v1172 = vpop.permute.xlu0 %1171
        %v1174 = vsel %vm879, %v1170, 0
        %v1177 = vsel %vm944, %v1172, 0
        %1179 = vmatprep.subr.bf16.mxu0 0
        %1180 = vmatpush1.bf16.msra.mxu0 %v1177
        %1181 = vmatprep.subr.bf16.mxu0 0
        %1182 = vmatpush1.bf16.msra.mxu0 0
        %1183 = vmatprep.subr.bf16.mxu0 0
        %1184 = vmatpush1.bf16.msra.mxu0 0
        %1185 = vmatprep.subr.bf16.mxu0 0
        %1186 = vmatpush1.bf16.msra.mxu0 0
        %1187 = vmatprep.subr.bf16.mxu0 0
        %1188 = vmatpush1.bf16.msra.mxu0 0
        %1189 = vmatprep.subr.bf16.mxu0 0
        %1190 = vmatpush1.bf16.msra.mxu0 0
        %1191 = vmatprep.subr.bf16.mxu0 0
        %1192 = vmatpush1.bf16.msra.mxu0 0
        %1193 = vmatprep.subr.bf16.mxu0 0
        %1194 = vmatpush1.bf16.msra.mxu0 0
        %1195 = vmatprep.subr.bf16.mxu0 0
        %1196 = vmatpush1.bf16.msra.mxu0 0
        %1197 = vmatprep.subr.bf16.mxu0 0
        %1198 = vmatpush1.bf16.msra.mxu0 0
        %1199 = vmatprep.subr.bf16.mxu0 0
        %1200 = vmatpush1.bf16.msra.mxu0 0
        %1201 = vmatprep.subr.bf16.mxu0 0
        %1202 = vmatpush1.bf16.msra.mxu0 0
        %1203 = vmatprep.subr.bf16.mxu0 0
        %1204 = vmatpush1.bf16.msra.mxu0 0
        %1205 = vmatprep.subr.bf16.mxu0 0
        %1206 = vmatpush1.bf16.msra.mxu0 0
        %1207 = vmatprep.subr.bf16.mxu0 0
        %1208 = vmatpush1.bf16.msra.mxu0 0
        %1209 = vmatprep.subr.bf16.mxu0 0
        %1210 = vmatpush1.bf16.msra.mxu0 0
        %1211 = vmatprep.mubr.bf16.mxu0 0
        %1212 = vmatmul.mubr.bf16.gmra.mrb[0].mxu0 %v1174
        %v1213 = vpop.f32.mrb[0].mxu0
        %v1214 = vadd.f32 0.0, %v1213
        %v1215 = vpop.f32.mrb[0].mxu0
        %v1216 = vpop.f32.mrb[0].mxu0
        %v1217 = vpop.f32.mrb[0].mxu0
        %1218 = vdwg.mxu0
        %v1219 = vpack.c.bf16 %v1214, %v1214
        %1220 = vrot.lane.b32.xlu0 %v876, 104
        %v1221 = vpop.permute.xlu0 %1220
        %1222 = vrot.lane.b32.xlu0 %v877, 104
        %v1223 = vpop.permute.xlu0 %1222
        %v1225 = vsel %vm879, %v1221, 0
        %v1228 = vsel %vm879, %v1223, 0
        %1230 = vmatprep.subr.bf16.mxu0 0
        %1231 = vmatpush1.bf16.xpose.msra.mxu0 %v1228
        %1232 = vmatprep.subr.bf16.mxu0 0
        %1233 = vmatpush1.bf16.xpose.msra.mxu0 0
        %1234 = vmatprep.subr.bf16.mxu0 0
        %1235 = vmatpush1.bf16.xpose.msra.mxu0 0
        %1236 = vmatprep.subr.bf16.mxu0 0
        %1237 = vmatpush1.bf16.xpose.msra.mxu0 0
        %1238 = vmatprep.subr.bf16.mxu0 0
        %1239 = vmatpush1.bf16.xpose.msra.mxu0 0
        %1240 = vmatprep.subr.bf16.mxu0 0
        %1241 = vmatpush1.bf16.xpose.msra.mxu0 0
        %1242 = vmatprep.subr.bf16.mxu0 0
        %1243 = vmatpush1.bf16.xpose.msra.mxu0 0
        %1244 = vmatprep.subr.bf16.mxu0 0
        %1245 = vmatpush1.bf16.xpose.msra.mxu0 0
        %1246 = vmatprep.subr.bf16.mxu0 0
        %1247 = vmatpush1.bf16.xpose.msra.mxu0 0
        %1248 = vmatprep.subr.bf16.mxu0 0
        %1249 = vmatpush1.bf16.xpose.msra.mxu0 0
        %1250 = vmatprep.subr.bf16.mxu0 0
        %1251 = vmatpush1.bf16.xpose.msra.mxu0 0
        %1252 = vmatprep.subr.bf16.mxu0 0
        %1253 = vmatpush1.bf16.xpose.msra.mxu0 0
        %1254 = vmatprep.subr.bf16.mxu0 0
        %1255 = vmatpush1.bf16.xpose.msra.mxu0 0
        %1256 = vmatprep.subr.bf16.mxu0 0
        %1257 = vmatpush1.bf16.xpose.msra.mxu0 0
        %1258 = vmatprep.subr.bf16.mxu0 0
        %1259 = vmatpush1.bf16.xpose.msra.mxu0 0
        %1260 = vmatprep.subr.bf16.mxu0 0
        %1261 = vmatpush1.bf16.xpose.msra.mxu0 0
        %1262 = vmatprep.mubr.bf16.mxu0 0
        %1263 = vmatmul.mubr.bf16.gmra.mrb[0].mxu0 %v1225
        %v1264 = vpop.f32.mrb[0].mxu0
        %v1265 = vadd.f32 0.0, %v1264
        %v1266 = vpop.f32.mrb[0].mxu0
        %v1267 = vpop.f32.mrb[0].mxu0
        %v1268 = vpop.f32.mrb[0].mxu0
        %1269 = vdwg.mxu0
        %v1270 = vmul.f32 %v1265, 0.35355338
        %v1271 = vfloor.f32 %v1270
        %v1272 = vadd.f32 %v1271, %v679
        %v1273 = vsel %vm879, %v1272, -inf
        %1274 = vmax.xlane.f32.xlu0 %v1273
        %v1275 = vpop.xlane.xlu0 %1274
        %v1276 = vsub.f32 %v1272, %v1275
        %v1277 = vmul.f32 %v1276, 1.442695
        %v1278 = vpow.pop %v1277
        %v1279 = vsel %vm879, %v1278, 0.0
        %1280 = vadd.xlane.f32.xlu0 %v1279
        %v1281 = vpop.xlane.xlu0 %1280
        %v1282 = vrcp.pop %v1281
        %v1283 = vmul.f32 %v1278, %v1282
        %v1284 = vpack.c.bf16 %v1283, %v1283
        %1285 = vrot.lane.b32.xlu0 %v878, 104
        %v1286 = vpop.permute.xlu0 %1285
        %v1288 = vsel %vm879, %v1284, 0
        %v1291 = vsel %vm944, %v1286, 0
        %1293 = vmatprep.subr.bf16.mxu0 0
        %1294 = vmatpush1.bf16.msra.mxu0 %v1291
        %1295 = vmatprep.subr.bf16.mxu0 0
        %1296 = vmatpush1.bf16.msra.mxu0 0
        %1297 = vmatprep.subr.bf16.mxu0 0
        %1298 = vmatpush1.bf16.msra.mxu0 0
        %1299 = vmatprep.subr.bf16.mxu0 0
        %1300 = vmatpush1.bf16.msra.mxu0 0
        %1301 = vmatprep.subr.bf16.mxu0 0
        %1302 = vmatpush1.bf16.msra.mxu0 0
        %1303 = vmatprep.subr.bf16.mxu0 0
        %1304 = vmatpush1.bf16.msra.mxu0 0
        %1305 = vmatprep.subr.bf16.mxu0 0
        %1306 = vmatpush1.bf16.msra.mxu0 0
        %1307 = vmatprep.subr.bf16.mxu0 0
        %1308 = vmatpush1.bf16.msra.mxu0 0
        %1309 = vmatprep.subr.bf16.mxu0 0
        %1310 = vmatpush1.bf16.msra.mxu0 0
        %1311 = vmatprep.subr.bf16.mxu0 0
        %1312 = vmatpush1.bf16.msra.mxu0 0
        %1313 = vmatprep.subr.bf16.mxu0 0
        %1314 = vmatpush1.bf16.msra.mxu0 0
        %1315 = vmatprep.subr.bf16.mxu0 0
        %1316 = vmatpush1.bf16.msra.mxu0 0
        %1317 = vmatprep.subr.bf16.mxu0 0
        %1318 = vmatpush1.bf16.msra.mxu0 0
        %1319 = vmatprep.subr.bf16.mxu0 0
        %1320 = vmatpush1.bf16.msra.mxu0 0
        %1321 = vmatprep.subr.bf16.mxu0 0
        %1322 = vmatpush1.bf16.msra.mxu0 0
        %1323 = vmatprep.subr.bf16.mxu0 0
        %1324 = vmatpush1.bf16.msra.mxu0 0
        %1325 = vmatprep.mubr.bf16.mxu0 0
        %1326 = vmatmul.mubr.bf16.gmra.mrb[0].mxu0 %v1288
        %v1327 = vpop.f32.mrb[0].mxu0
        %v1328 = vadd.f32 0.0, %v1327
        %v1329 = vpop.f32.mrb[0].mxu0
        %v1330 = vpop.f32.mrb[0].mxu0
        %v1331 = vpop.f32.mrb[0].mxu0
        %1332 = vdwg.mxu0
        %v1333 = vpack.c.bf16 %v1328, %v1328
        %1335 = vrot.lane.b32.xlu0 %v1105, 8
        %v1336 = vpop.permute.xlu0 %1335
        %1338 = vrot.lane.b32.xlu0 %v1219, 16
        %v1339 = vpop.permute.xlu0 %1338
        %1341 = vrot.lane.b32.xlu0 %v1333, 24
        %v1342 = vpop.permute.xlu0 %1341
        %v1345 = vsel %vm879, %v988, %v1336
        %vm1346 = vcmask 130048
        %v1348 = vsel %vm1346, %v1345, %v1339
        %vm1349 = vcmask 195584
        %v1351 = vsel %vm1349, %v1348, %v1342
        %v1352 = vld [vmem:[#allocation2] sm:$0xff]
        %v1353 = vld [vmem:[#allocation12] sm:$0xf]
        %v1354 = vld [vmem:[#allocation12 + $0x4] sm:$0xf]
        %v1355 = vld [vmem:[#allocation12 + $0x8] sm:$0xf]
        %v1356 = vld [vmem:[#allocation12 + $0xc] sm:$0xf]
        %v1361 = vunpack.c.l.b16 %v1353
        %v1362 = vunpack.c.l.b16 %v1354
        %v1363 = vunpack.c.l.b16 %v1355
        %v1364 = vunpack.c.l.b16 %v1356
        %v1365 = vpack.c.b16 %v1362, %v1361
        %v1366 = vpack.c.b16 %v1364, %v1363
        %v1369 = vsel %vm703, %v1351, 0
        %1371 = vmatprep.subr.bf16.mxu0 0
        %1372 = vmatpush1.bf16.msra.mxu0 %v1365
        %1373 = vmatprep.subr.bf16.mxu0 0
        %1374 = vmatpush1.bf16.msra.mxu0 %v1366
        %1375 = vmatprep.subr.bf16.mxu0 0
        %1376 = vmatpush1.bf16.msra.mxu0 0
        %1377 = vmatprep.subr.bf16.mxu0 0
        %1378 = vmatpush1.bf16.msra.mxu0 0
        %1379 = vmatprep.subr.bf16.mxu0 0
        %1380 = vmatpush1.bf16.msra.mxu0 0
        %1381 = vmatprep.subr.bf16.mxu0 0
        %1382 = vmatpush1.bf16.msra.mxu0 0
        %1383 = vmatprep.subr.bf16.mxu0 0
        %1384 = vmatpush1.bf16.msra.mxu0 0
        %1385 = vmatprep.subr.bf16.mxu0 0
        %1386 = vmatpush1.bf16.msra.mxu0 0
        %1387 = vmatprep.subr.bf16.mxu0 0
        %1388 = vmatpush1.bf16.msra.mxu0 0
        %1389 = vmatprep.subr.bf16.mxu0 0
        %1390 = vmatpush1.bf16.msra.mxu0 0
        %1391 = vmatprep.subr.bf16.mxu0 0
        %1392 = vmatpush1.bf16.msra.mxu0 0
        %1393 = vmatprep.subr.bf16.mxu0 0
        %1394 = vmatpush1.bf16.msra.mxu0 0
        %1395 = vmatprep.subr.bf16.mxu0 0
        %1396 = vmatpush1.bf16.msra.mxu0 0
        %1397 = vmatprep.subr.bf16.mxu0 0
        %1398 = vmatpush1.bf16.msra.mxu0 0
        %1399 = vmatprep.subr.bf16.mxu0 0
        %1400 = vmatpush1.bf16.msra.mxu0 0
        %1401 = vmatprep.subr.bf16.mxu0 0
        %1402 = vmatpush1.bf16.msra.mxu0 0
        %1403 = vmatprep.mubr.bf16.mxu0 0
        %1404 = vmatmul.mubr.bf16.gmra.mrb[0].mxu0 %v1369
        %v1405 = vpop.f32.mrb[0].mxu0
        %v1406 = vadd.f32 0.0, %v1405
        %v1407 = vpop.f32.mrb[0].mxu0
        %v1408 = vpop.f32.mrb[0].mxu0
        %v1409 = vpop.f32.mrb[0].mxu0
        %1410 = vdwg.mxu0
        %v1411 = vadd.f32 %v1352, %v1406
        %1412 = vst.msk [vmem:[#allocation2] sm:$0xff] %vm703, %v1411
        // Predicated region
        $region101: #{tpu_custom_call.1} parent=71 // pred_check
          %p1413 = pneg %p670
        $region102: #{tpu_custom_call.1} parent=71 // pred_check_branch
          %1415 = sbr.rel (%p1413) target = $region104
        $region103: #{tpu_custom_call.1} parent=71 // pred_region
          %v1416 = vld [vmem:[#allocation2] sm:$0xff]
          %v1417 = vld [vmem:[%s9] sm:$0x1]
          %v1419 = vlaneseq
          %v1420 = vshrl.u32 %v1419, 7
          %v1421 = vsub.s32 0, %v1420
          %v1422 = vrot.slane %v1417, %v1421
          %v1424 = vadd.f32 %v1416, %v1422
          %v1425 = vadd.f32 %v677, %v1424
          %v1426 = vld [vmem:[%s10] sm:$0x1]
          %v1427 = vld [vmem:[%s11] sm:$0x1]
          %v1428 = vsel %vm703, %v1425, 0.0
          %1429 = vadd.xlane.f32.xlu0 %v1428
          %v1430 = vpop.xlane.xlu0 %1429
          %v1431 = vrcp.pop 32.0
          %v1432 = vmul.f32 %v1430, %v1431
          %v1433 = vsub.f32 %v1425, %v1432
          %v1434 = vmul.f32 %v1433, %v1433
          %v1435 = vsel %vm703, %v1434, 0.0
          %1436 = vadd.xlane.f32.xlu0 %v1435
          %v1437 = vpop.xlane.xlu0 %1436
          %v1438 = vmul.f32 %v1437, %v1431
          %v1439 = vadd.f32 %v1438, 1e-05
          %v1440 = vrsqrt.pop %v1439
          %v1441 = vmul.f32 %v1433, %v1440
          %v1443 = vlaneseq
          %v1444 = vshrl.u32 %v1443, 7
          %v1445 = vsub.s32 0, %v1444
          %v1446 = vrot.slane %v1426, %v1445
          %v1448 = vmul.f32 %v1441, %v1446
          %v1450 = vlaneseq
          %v1451 = vshrl.u32 %v1450, 7
          %v1452 = vsub.s32 0, %v1451
          %v1453 = vrot.slane %v1427, %v1452
          %v1455 = vadd.f32 %v1448, %v1453
          %1456 = vst.msk [vmem:[%s653] sm:$0xff] %vm703, %v1455
        $region104: #{tpu_custom_call.1} parent=71 // pred_fallthru
          _
        %s1457 = sand.u32 %s389, 1
        %s1458 = scalar_lea.sflag [#allocation5], %s1457
        %s1459 = sand.u32 %s389, 1
        %s1460 = smul.addr %s1459, 8
        %s1461 = scalar_lea.vmem [#allocation14], %s1460
        // Predicated region
        $region105: #{tpu_custom_call.1} parent=71 // pred_check
          %p1462 = pneg %p399
        $region106: #{tpu_custom_call.1} parent=71 // pred_check_branch
          %1464 = sbr.rel (%p1462) target = $region108
        $region107: #{tpu_custom_call.1} parent=71 // pred_region
          %s1466 = ssub.s32 128, 128
          %1467 = vsyncadd %s1458, %s1466
          %s1468 = sadd.s32 %s41, %s40
          %s1469 = smul.addr %s1468, 128
          %s1470 = scalar_lea.hbm %s13, %s1469
          %s1472 = sshll.u32 %s1461, 4
          %s1473 = int_to_ptr.vmem [resolvable:$true] %s1472
          %1475 = dma.vmem_to_hbm [thread:$0]  %s1473, 128, %s1470, %s1458
        $region108: #{tpu_custom_call.1} parent=71 // pred_fallthru
          _
      $region72: #{tpu_custom_call.1} parent=5 // pred_fallthru
        _
      %p1476 = scmp.le.s32.totalorder 2, %s30
      // Predicated region
      $region109: #{tpu_custom_call.1} parent=5 // pred_check
        %p1477 = pneg %p1476
      $region110: #{tpu_custom_call.1} parent=5 // pred_check_branch
        %1479 = sbr.rel (%p1477) target = $region112
      $region111: #{tpu_custom_call.1} parent=5 // pred_region
        %s1480 = ssub.s32 %s30, 2
        // Predicated region
        $region113: #{tpu_custom_call.1} parent=111 // pred_check
          %p1481 = pneg %p405
        $region114: #{tpu_custom_call.1} parent=111 // pred_check_branch
          %1483 = sbr.rel (%p1481) target = $region116
        $region115: #{tpu_custom_call.1} parent=111 // pred_region
          %s1484 = sand.u32 %s390, 1
          %s1485 = scalar_lea.sflag [#allocation5], %s1484
          %s1486 = sand.u32 %s390, 1
          %s1487 = smul.addr %s1486, 8
          %s1488 = scalar_lea.vmem [#allocation14], %s1487
          %1489 = dma.done %s1485, 128
        $region116: #{tpu_custom_call.1} parent=111 // pred_fallthru
          _
      $region112: #{tpu_custom_call.1} parent=5 // pred_fallthru
        _
    $region6: #{tpu_custom_call.1} parent=1 // loop_footer
      %s34 = sadd.s32 1, %s30
    $region7: #{tpu_custom_call.1} parent=1 // loop_footer_branch
      %29 = sbr.rel target = $region3
    $region8: #{tpu_custom_call.1} parent=1 // loop_exit
      _
    %1490 = vsyncpa [#allocation4], 1
    %s1491 = scalar_lea.sflag [#allocation4], 1
    %1492 = vsyncpa %s1491, 1
    %1493 = vsyncpa [#allocation7], 1
    %s1494 = scalar_lea.sflag [#allocation7], 1
    %1495 = vsyncpa %s1494, 1
    %1496 = vsyncpa [#allocation10], 1
    %1497 = vsyncpa [#allocation13], 1
    %1498 = vsyncpa [#allocation5], 1
    %s1499 = scalar_lea.sflag [#allocation5], 1
    %1500 = vsyncpa %s1499, 1

</llo_original>
